<compile_context>
chip_gen: v7x
topology: tpu7x:2x2x1
jax: 0.10.0
libtpu: 0.0.40
codegen_flags: <defaults>
</compile_context>

<pallas_src>
import functools

import jax
import jax.numpy as jnp
from jax.experimental import pallas as pl
from jax.experimental.pallas import tpu as pltpu

MNIST_INPUT_RESOLUTION = 28
IN_FEATURES = MNIST_INPUT_RESOLUTION * MNIST_INPUT_RESOLUTION  # 784
IN_FEATURES_PAD = 896  # 7 * 128, zero-padded K
NEURONS = (256, 128)
NUM_CLASSES = 10
PAD_OUT = 128  # pad final layer 10 -> 128 lanes for dense stores

# ---- config (compile-time constants baked into the kernel) ----
BETA = 0.9
THR1 = 1.0
THR2 = 1.0
THR3 = 1.0
NUM_STEPS = 5
# reset_mechanism = 'subtract' (on_spike_reset_to_zero=False)

MXU_DTYPE = jnp.bfloat16   # MXU operand dtype; accumulation stays f32
MAX_BATCH_TILE = 256       # rows of M per grid step (fits VMEM on v7x too)


def _round_up(v, m):
    return (v + m - 1) // m * m


def _leaky_step(cur, mem, thr):
    """snntorch Leaky ('subtract' reset): reset based on previous mem,
    mem' = beta*mem + cur - reset*thr ; spk = (mem' > thr).  All f32."""
    reset = (mem > thr).astype(jnp.float32)
    new_mem = BETA * mem + cur - reset * thr
    spk = (new_mem > thr).astype(jnp.float32)
    return spk, new_mem


def netfc_kernel(x_ref, w1_ref, b1_ref, w2_ref, b2_ref, w3_ref, b3_ref,
                 spk3_ref, mem3_ref, *, num_steps, batch_tile):
    tb = batch_tile

    x = x_ref[...]        # (TB, 896) bf16 — identical every step (x.flatten(1))
    w1 = w1_ref[...]      # (896, 256) bf16
    w2 = w2_ref[...]      # (256, 128) bf16
    w3 = w3_ref[...]      # (128, 128) bf16 (padded 10 -> 128 cols)

    # Hoist bias broadcasts out of the unrolled time loop (broadcast_in_dim
    # is not CSE'd by JAX).  Biases stay f32; they are added post-matmul.
    b1 = jnp.broadcast_to(b1_ref[...], (tb, NEURONS[0]))
    b2 = jnp.broadcast_to(b2_ref[...], (tb, NEURONS[1]))
    b3 = jnp.broadcast_to(b3_ref[...], (tb, PAD_OUT))

    mem1 = jnp.zeros((tb, NEURONS[0]), jnp.float32)
    mem2 = jnp.zeros((tb, NEURONS[1]), jnp.float32)
    mem3 = jnp.zeros((tb, PAD_OUT), jnp.float32)

    # Time recurrence fully unrolled in the kernel body (equivalent to
    # lax.fori_loop(..., unroll=True) at this trip count): no per-grid-step
    # pipeline overhead, membrane state never round-trips through HBM.
    for t in range(num_steps):
        # layer 1: fc1 + lif1
        cur1 = jnp.dot(x, w1, preferred_element_type=jnp.float32) + b1
        spk1, mem1 = _leaky_step(cur1, mem1, THR1)

        # layer 2: fc2 + lif2
        cur2 = jnp.dot(spk1.astype(MXU_DTYPE), w2,
                       preferred_element_type=jnp.float32) + b2
        spk2, mem2 = _leaky_step(cur2, mem2, THR2)

        # layer 3: fc3 + dropout + lif3
        # TODO(synk): nn.Dropout(p1) is identity in eval mode (p1=0.0);
        # training-mode dropout masking is not implemented here.
        cur3 = jnp.dot(spk2.astype(MXU_DTYPE), w3,
                       preferred_element_type=jnp.float32) + b3
        spk3, mem3 = _leaky_step(cur3, mem3, THR3)

        spk3_ref[t] = spk3
        mem3_ref[t] = mem3


@functools.partial(jax.jit, static_argnames=("num_steps",))
def netfc_forward(x_nchw, params, num_steps=NUM_STEPS):
    """Returns (spk3_rec, mem3_rec), each (num_steps, B, 10)."""
    B = x_nchw.shape[0]
    x = x_nchw.reshape(B, -1).astype(jnp.float32)  # x.flatten(1)

    # --- batch tiling: pad to a sublane-aligned tile, grid over tiles ---
    TB = min(_round_up(B, 8), MAX_BATCH_TILE)
    B_pad = _round_up(B, TB)
    n_tiles = B_pad // TB

    # --- pad K 784 -> 896 (zero columns) and cast MXU operands to bf16 ---
    xp = jnp.zeros((B_pad, IN_FEATURES_PAD), jnp.float32)
    xp = xp.at[:B, :IN_FEATURES].set(x).astype(MXU_DTYPE)

    w1, b1, w2, b2, w3, b3 = params
    w1p = jnp.zeros((IN_FEATURES_PAD, NEURONS[0]), jnp.float32)
    w1p = w1p.at[:IN_FEATURES, :].set(w1).astype(MXU_DTYPE)
    w2m = w2.astype(MXU_DTYPE)
    # pad final layer 10 -> PAD_OUT lanes (zero cols/bias never spike)
    w3p = jnp.zeros((NEURONS[1], PAD_OUT), jnp.float32)
    w3p = w3p.at[:, :NUM_CLASSES].set(w3).astype(MXU_DTYPE)
    b3p = jnp.zeros((1, PAD_OUT), jnp.float32).at[:, :NUM_CLASSES].set(b3)
    b1r = b1.reshape(1, -1)
    b2r = b2.reshape(1, -1)

    kernel = functools.partial(netfc_kernel, num_steps=num_steps, batch_tile=TB)
    const2d = lambda shape: pl.BlockSpec(shape, lambda b: (0, 0))

    spk3_rec, mem3_rec = pl.pallas_call(
        kernel,
        out_shape=(
            jax.ShapeDtypeStruct((num_steps, B_pad, PAD_OUT), jnp.float32),
            jax.ShapeDtypeStruct((num_steps, B_pad, PAD_OUT), jnp.float32),
        ),
        grid_spec=pltpu.PrefetchScalarGridSpec(
            num_scalar_prefetch=0,
            grid=(n_tiles,),                                  # batch tiles
            in_specs=[
                pl.BlockSpec((TB, IN_FEATURES_PAD), lambda b: (b, 0)),  # x
                const2d((IN_FEATURES_PAD, NEURONS[0])),                 # w1
                const2d((1, NEURONS[0])),                               # b1
                const2d((NEURONS[0], NEURONS[1])),                      # w2
                const2d((1, NEURONS[1])),                               # b2
                const2d((NEURONS[1], PAD_OUT)),                         # w3
                const2d((1, PAD_OUT)),                                  # b3
            ],
            out_specs=[
                pl.BlockSpec((num_steps, TB, PAD_OUT), lambda b: (0, b, 0)),
                pl.BlockSpec((num_steps, TB, PAD_OUT), lambda b: (0, b, 0)),
            ],
        ),
        compiler_params=pltpu.CompilerParams(
            dimension_semantics=("parallel",),   # batch tiles are independent
        ),
    )(xp, w1p, b1r, w2m, b2r, w3p, b3p)

    return (spk3_rec[:, :B, :NUM_CLASSES], mem3_rec[:, :B, :NUM_CLASSES])


def netfc_reference(x_nchw, params, num_steps=NUM_STEPS):
    """Pure-JAX reference matching the PyTorch forward (non-binarized branch),
    using the same bf16-at-MXU-input / f32-accumulate numerics as the kernel."""
    w1, b1, w2, b2, w3, b3 = params
    B = x_nchw.shape[0]
    x = x_nchw.reshape(B, -1).astype(jnp.float32).astype(MXU_DTYPE)
    w1m = w1.astype(MXU_DTYPE)
    w2m = w2.astype(MXU_DTYPE)
    w3m = w3.astype(MXU_DTYPE)

    mem1 = jnp.zeros((B, NEURONS[0]), jnp.float32)
    mem2 = jnp.zeros((B, NEURONS[1]), jnp.float32)
    mem3 = jnp.zeros((B, NUM_CLASSES), jnp.float32)
    spk3_rec, mem3_rec = [], []
    for _ in range(num_steps):
        cur1 = jnp.dot(x, w1m, preferred_element_type=jnp.float32) + b1
        spk1, mem1 = _leaky_step(cur1, mem1, THR1)
        cur2 = jnp.dot(spk1.astype(MXU_DTYPE), w2m,
                       preferred_element_type=jnp.float32) + b2
        spk2, mem2 = _leaky_step(cur2, mem2, THR2)
        cur3 = jnp.dot(spk2.astype(MXU_DTYPE), w3m,
                       preferred_element_type=jnp.float32) + b3
        spk3, mem3 = _leaky_step(cur3, mem3, THR3)
        spk3_rec.append(spk3)
        mem3_rec.append(mem3)
    return jnp.stack(spk3_rec, 0), jnp.stack(mem3_rec, 0)


def init_params(key):
    """Deterministic init mirroring nn.Linear default (U(-1/sqrt(fan_in), ...)).
    Weights stored as (in_features, out_features)."""
    ks = jax.random.split(key, 6)

    def linear(kw, kb, fan_in, fan_out):
        bound = 1.0 / jnp.sqrt(fan_in)
        w = jax.random.uniform(kw, (fan_in, fan_out), jnp.float32, -bound, bound)
        b = jax.random.uniform(kb, (fan_out,), jnp.float32, -bound, bound)
        return w, b

    w1, b1 = linear(ks[0], ks[1], IN_FEATURES, NEURONS[0])
    w2, b2 = linear(ks[2], ks[3], NEURONS[0], NEURONS[1])
    w3, b3 = linear(ks[4], ks[5], NEURONS[1], NUM_CLASSES)
    return (w1, b1, w2, b2, w3, b3)


if __name__ == "__main__":
    key = jax.random.PRNGKey(0)
    kx, kp = jax.random.split(key)

    B = 2
    # NCHW MNIST-style input (B, 1, 28, 28)
    x = jax.random.uniform(
        kx, (B, 1, MNIST_INPUT_RESOLUTION, MNIST_INPUT_RESOLUTION), jnp.float32)
    params = init_params(kp)

    spk3, mem3 = netfc_forward(x, params)
    jax.block_until_ready((spk3, mem3))

    spk3_ref, mem3_ref = netfc_reference(x, params)
    assert spk3.shape == (NUM_STEPS, B, NUM_CLASSES)
    assert mem3.shape == (NUM_STEPS, B, NUM_CLASSES)
    assert jnp.allclose(spk3, spk3_ref, atol=1e-5), "spk3 mismatch"
    assert jnp.allclose(mem3, mem3_ref, atol=2e-3), "mem3 mismatch"

    print("KERNEL_OK")
</pallas_src>

<mosaic_0001>
module attributes {stable_mosaic.version = 11 : i64} {
  func.func @netfc_kernel(%arg0: i32, %arg1: memref<8x896xbf16, #tpu.memory_space<vmem>>, %arg2: memref<896x256xbf16, #tpu.memory_space<vmem>>, %arg3: memref<1x256xf32, #tpu.memory_space<vmem>>, %arg4: memref<256x128xbf16, #tpu.memory_space<vmem>>, %arg5: memref<1x128xf32, #tpu.memory_space<vmem>>, %arg6: memref<128x128xbf16, #tpu.memory_space<vmem>>, %arg7: memref<1x128xf32, #tpu.memory_space<vmem>>, %arg8: memref<5x8x128xf32, #tpu.memory_space<vmem>>, %arg9: memref<5x8x128xf32, #tpu.memory_space<vmem>>) attributes {dimension_semantics = [#tpu.dimension_semantics<parallel>], iteration_bounds = array<i64: 1>, scalar_prefetch = 0 : i64, scratch_operands = 0 : i64, tpu.core_type = #tpu.core_type<tc>, window_params = [{transform_indices = @transform_0, window_bounds = array<i64: 8, 896>}, {pipeline_mode = #tpu.pipeline_mode<synchronous>, transform_indices = @transform_1, window_bounds = array<i64: 896, 256>}, {pipeline_mode = #tpu.pipeline_mode<synchronous>, transform_indices = @transform_2, window_bounds = array<i64: 1, 256>}, {pipeline_mode = #tpu.pipeline_mode<synchronous>, transform_indices = @transform_3, window_bounds = array<i64: 256, 128>}, {pipeline_mode = #tpu.pipeline_mode<synchronous>, transform_indices = @transform_4, window_bounds = array<i64: 1, 128>}, {pipeline_mode = #tpu.pipeline_mode<synchronous>, transform_indices = @transform_5, window_bounds = array<i64: 128, 128>}, {pipeline_mode = #tpu.pipeline_mode<synchronous>, transform_indices = @transform_6, window_bounds = array<i64: 1, 128>}, {transform_indices = @transform_7, window_bounds = array<i64: 5, 8, 128>}, {transform_indices = @transform_8, window_bounds = array<i64: 5, 8, 128>}]} {
    %c0 = arith.constant 0 : index
    %c0_0 = arith.constant 0 : index
    %0 = vector.load %arg1[%c0, %c0_0] : memref<8x896xbf16, #tpu.memory_space<vmem>>, vector<8x896xbf16>
    %c0_1 = arith.constant 0 : index
    %c0_2 = arith.constant 0 : index
    %1 = vector.load %arg2[%c0_1, %c0_2] : memref<896x256xbf16, #tpu.memory_space<vmem>>, vector<896x256xbf16>
    %c0_3 = arith.constant 0 : index
    %c0_4 = arith.constant 0 : index
    %2 = vector.load %arg4[%c0_3, %c0_4] : memref<256x128xbf16, #tpu.memory_space<vmem>>, vector<256x128xbf16>
    %c0_5 = arith.constant 0 : index
    %c0_6 = arith.constant 0 : index
    %3 = vector.load %arg6[%c0_5, %c0_6] : memref<128x128xbf16, #tpu.memory_space<vmem>>, vector<128x128xbf16>
    %c0_7 = arith.constant 0 : index
    %c0_8 = arith.constant 0 : index
    %4 = vector.load %arg3[%c0_7, %c0_8] : memref<1x256xf32, #tpu.memory_space<vmem>>, vector<1x256xf32>
    %5 = vector.shape_cast %4 : vector<1x256xf32> to vector<1x256xf32>
    %6 = vector.broadcast %5 : vector<1x256xf32> to vector<8x256xf32>
    %c0_9 = arith.constant 0 : index
    %c0_10 = arith.constant 0 : index
    %7 = vector.load %arg5[%c0_9, %c0_10] : memref<1x128xf32, #tpu.memory_space<vmem>>, vector<1x128xf32>
    %8 = vector.shape_cast %7 : vector<1x128xf32> to vector<1x128xf32>
    %9 = vector.broadcast %8 : vector<1x128xf32> to vector<8x128xf32>
    %c0_11 = arith.constant 0 : index
    %c0_12 = arith.constant 0 : index
    %10 = vector.load %arg7[%c0_11, %c0_12] : memref<1x128xf32, #tpu.memory_space<vmem>>, vector<1x128xf32>
    %11 = vector.shape_cast %10 : vector<1x128xf32> to vector<1x128xf32>
    %12 = vector.broadcast %11 : vector<1x128xf32> to vector<8x128xf32>
    %cst = arith.constant 0.000000e+00 : f32
    %13 = vector.broadcast %cst : f32 to vector<8x256xf32>
    %cst_13 = arith.constant 0.000000e+00 : f32
    %14 = vector.broadcast %cst_13 : f32 to vector<8x128xf32>
    %cst_14 = arith.constant 0.000000e+00 : f32
    %15 = vector.broadcast %cst_14 : f32 to vector<8x128xf32>
    %cst_15 = arith.constant dense<0.000000e+00> : vector<8x256xf32>
    %16 = tpu.matmul %0, %1, %cst_15 {dimension_numbers = #tpu.dot_dimension_numbers<[1], [0], [0], [1], [0, 0, 1, 1], [], []>} : vector<8x896xbf16>, vector<896x256xbf16>, vector<8x256xf32> -> vector<8x256xf32>
    %17 = arith.addf %16, %6 : vector<8x256xf32>
    %cst_16 = arith.constant 1.000000e+00 : f32
    %18 = vector.broadcast %cst_16 : f32 to vector<8x256xf32>
    %19 = arith.cmpf ogt, %13, %18 : vector<8x256xf32>
    %20 = arith.extui %19 : vector<8x256xi1> to vector<8x256xi32>
    %21 = arith.sitofp %20 : vector<8x256xi32> to vector<8x256xf32>
    %cst_17 = arith.constant 0.899999976 : f32
    %22 = vector.broadcast %cst_17 : f32 to vector<8x256xf32>
    %23 = arith.mulf %22, %13 : vector<8x256xf32>
    %24 = arith.addf %23, %17 : vector<8x256xf32>
    %cst_18 = arith.constant 1.000000e+00 : f32
    %25 = vector.broadcast %cst_18 : f32 to vector<8x256xf32>
    %26 = arith.mulf %21, %25 : vector<8x256xf32>
    %27 = arith.subf %24, %26 : vector<8x256xf32>
    %cst_19 = arith.constant 1.000000e+00 : f32
    %28 = vector.broadcast %cst_19 : f32 to vector<8x256xf32>
    %29 = arith.cmpf ogt, %27, %28 : vector<8x256xf32>
    %30 = arith.extui %29 : vector<8x256xi1> to vector<8x256xi32>
    %31 = arith.sitofp %30 : vector<8x256xi32> to vector<8x256xf32>
    %32 = arith.truncf %31 : vector<8x256xf32> to vector<8x256xbf16>
    %cst_20 = arith.constant dense<0.000000e+00> : vector<8x128xf32>
    %33 = tpu.matmul %32, %2, %cst_20 {dimension_numbers = #tpu.dot_dimension_numbers<[1], [0], [0], [1], [0, 0, 1, 1], [], []>} : vector<8x256xbf16>, vector<256x128xbf16>, vector<8x128xf32> -> vector<8x128xf32>
    %34 = arith.addf %33, %9 : vector<8x128xf32>
    %cst_21 = arith.constant 1.000000e+00 : f32
    %35 = vector.broadcast %cst_21 : f32 to vector<8x128xf32>
    %36 = arith.cmpf ogt, %14, %35 : vector<8x128xf32>
    %37 = arith.extui %36 : vector<8x128xi1> to vector<8x128xi32>
    %38 = arith.sitofp %37 : vector<8x128xi32> to vector<8x128xf32>
    %cst_22 = arith.constant 0.899999976 : f32
    %39 = vector.broadcast %cst_22 : f32 to vector<8x128xf32>
    %40 = arith.mulf %39, %14 : vector<8x128xf32>
    %41 = arith.addf %40, %34 : vector<8x128xf32>
    %cst_23 = arith.constant 1.000000e+00 : f32
    %42 = vector.broadcast %cst_23 : f32 to vector<8x128xf32>
    %43 = arith.mulf %38, %42 : vector<8x128xf32>
    %44 = arith.subf %41, %43 : vector<8x128xf32>
    %cst_24 = arith.constant 1.000000e+00 : f32
    %45 = vector.broadcast %cst_24 : f32 to vector<8x128xf32>
    %46 = arith.cmpf ogt, %44, %45 : vector<8x128xf32>
    %47 = arith.extui %46 : vector<8x128xi1> to vector<8x128xi32>
    %48 = arith.sitofp %47 : vector<8x128xi32> to vector<8x128xf32>
    %49 = arith.truncf %48 : vector<8x128xf32> to vector<8x128xbf16>
    %cst_25 = arith.constant dense<0.000000e+00> : vector<8x128xf32>
    %50 = tpu.matmul %49, %3, %cst_25 {dimension_numbers = #tpu.dot_dimension_numbers<[1], [0], [0], [1], [0, 0, 1, 1], [], []>} : vector<8x128xbf16>, vector<128x128xbf16>, vector<8x128xf32> -> vector<8x128xf32>
    %51 = arith.addf %50, %12 : vector<8x128xf32>
    %cst_26 = arith.constant 1.000000e+00 : f32
    %52 = vector.broadcast %cst_26 : f32 to vector<8x128xf32>
    %53 = arith.cmpf ogt, %15, %52 : vector<8x128xf32>
    %54 = arith.extui %53 : vector<8x128xi1> to vector<8x128xi32>
    %55 = arith.sitofp %54 : vector<8x128xi32> to vector<8x128xf32>
    %cst_27 = arith.constant 0.899999976 : f32
    %56 = vector.broadcast %cst_27 : f32 to vector<8x128xf32>
    %57 = arith.mulf %56, %15 : vector<8x128xf32>
    %58 = arith.addf %57, %51 : vector<8x128xf32>
    %cst_28 = arith.constant 1.000000e+00 : f32
    %59 = vector.broadcast %cst_28 : f32 to vector<8x128xf32>
    %60 = arith.mulf %55, %59 : vector<8x128xf32>
    %61 = arith.subf %58, %60 : vector<8x128xf32>
    %cst_29 = arith.constant 1.000000e+00 : f32
    %62 = vector.broadcast %cst_29 : f32 to vector<8x128xf32>
    %63 = arith.cmpf ogt, %61, %62 : vector<8x128xf32>
    %64 = arith.extui %63 : vector<8x128xi1> to vector<8x128xi32>
    %65 = arith.sitofp %64 : vector<8x128xi32> to vector<8x128xf32>
    %c0_30 = arith.constant 0 : index
    %c0_31 = arith.constant 0 : index
    %c0_32 = arith.constant 0 : index
    %66 = vector.load %arg8[%c0_30, %c0_31, %c0_32] : memref<5x8x128xf32, #tpu.memory_space<vmem>>, vector<1x8x128xf32>
    %67 = vector.shape_cast %66 : vector<1x8x128xf32> to vector<8x128xf32>
    %68 = vector.shape_cast %65 : vector<8x128xf32> to vector<1x8x128xf32>
    tpu.vector_store %arg8[%c0_30, %c0_31, %c0_32], %68 {strides = array<i32>} : memref<5x8x128xf32, #tpu.memory_space<vmem>>, vector<1x8x128xf32>,
    %c0_33 = arith.constant 0 : index
    %c0_34 = arith.constant 0 : index
    %c0_35 = arith.constant 0 : index
    %69 = vector.load %arg9[%c0_33, %c0_34, %c0_35] : memref<5x8x128xf32, #tpu.memory_space<vmem>>, vector<1x8x128xf32>
    %70 = vector.shape_cast %69 : vector<1x8x128xf32> to vector<8x128xf32>
    %71 = vector.shape_cast %61 : vector<8x128xf32> to vector<1x8x128xf32>
    tpu.vector_store %arg9[%c0_33, %c0_34, %c0_35], %71 {strides = array<i32>} : memref<5x8x128xf32, #tpu.memory_space<vmem>>, vector<1x8x128xf32>,
    %cst_36 = arith.constant dense<0.000000e+00> : vector<8x256xf32>
    %72 = tpu.matmul %0, %1, %cst_36 {dimension_numbers = #tpu.dot_dimension_numbers<[1], [0], [0], [1], [0, 0, 1, 1], [], []>} : vector<8x896xbf16>, vector<896x256xbf16>, vector<8x256xf32> -> vector<8x256xf32>
    %73 = arith.addf %72, %6 : vector<8x256xf32>
    %cst_37 = arith.constant 1.000000e+00 : f32
    %74 = vector.broadcast %cst_37 : f32 to vector<8x256xf32>
    %75 = arith.cmpf ogt, %27, %74 : vector<8x256xf32>
    %76 = arith.extui %75 : vector<8x256xi1> to vector<8x256xi32>
    %77 = arith.sitofp %76 : vector<8x256xi32> to vector<8x256xf32>
    %cst_38 = arith.constant 0.899999976 : f32
    %78 = vector.broadcast %cst_38 : f32 to vector<8x256xf32>
    %79 = arith.mulf %78, %27 : vector<8x256xf32>
    %80 = arith.addf %79, %73 : vector<8x256xf32>
    %cst_39 = arith.constant 1.000000e+00 : f32
    %81 = vector.broadcast %cst_39 : f32 to vector<8x256xf32>
    %82 = arith.mulf %77, %81 : vector<8x256xf32>
    %83 = arith.subf %80, %82 : vector<8x256xf32>
    %cst_40 = arith.constant 1.000000e+00 : f32
    %84 = vector.broadcast %cst_40 : f32 to vector<8x256xf32>
    %85 = arith.cmpf ogt, %83, %84 : vector<8x256xf32>
    %86 = arith.extui %85 : vector<8x256xi1> to vector<8x256xi32>
    %87 = arith.sitofp %86 : vector<8x256xi32> to vector<8x256xf32>
    %88 = arith.truncf %87 : vector<8x256xf32> to vector<8x256xbf16>
    %cst_41 = arith.constant dense<0.000000e+00> : vector<8x128xf32>
    %89 = tpu.matmul %88, %2, %cst_41 {dimension_numbers = #tpu.dot_dimension_numbers<[1], [0], [0], [1], [0, 0, 1, 1], [], []>} : vector<8x256xbf16>, vector<256x128xbf16>, vector<8x128xf32> -> vector<8x128xf32>
    %90 = arith.addf %89, %9 : vector<8x128xf32>
    %cst_42 = arith.constant 1.000000e+00 : f32
    %91 = vector.broadcast %cst_42 : f32 to vector<8x128xf32>
    %92 = arith.cmpf ogt, %44, %91 : vector<8x128xf32>
    %93 = arith.extui %92 : vector<8x128xi1> to vector<8x128xi32>
    %94 = arith.sitofp %93 : vector<8x128xi32> to vector<8x128xf32>
    %cst_43 = arith.constant 0.899999976 : f32
    %95 = vector.broadcast %cst_43 : f32 to vector<8x128xf32>
    %96 = arith.mulf %95, %44 : vector<8x128xf32>
    %97 = arith.addf %96, %90 : vector<8x128xf32>
    %cst_44 = arith.constant 1.000000e+00 : f32
    %98 = vector.broadcast %cst_44 : f32 to vector<8x128xf32>
    %99 = arith.mulf %94, %98 : vector<8x128xf32>
    %100 = arith.subf %97, %99 : vector<8x128xf32>
    %cst_45 = arith.constant 1.000000e+00 : f32
    %101 = vector.broadcast %cst_45 : f32 to vector<8x128xf32>
    %102 = arith.cmpf ogt, %100, %101 : vector<8x128xf32>
    %103 = arith.extui %102 : vector<8x128xi1> to vector<8x128xi32>
    %104 = arith.sitofp %103 : vector<8x128xi32> to vector<8x128xf32>
    %105 = arith.truncf %104 : vector<8x128xf32> to vector<8x128xbf16>
    %cst_46 = arith.constant dense<0.000000e+00> : vector<8x128xf32>
    %106 = tpu.matmul %105, %3, %cst_46 {dimension_numbers = #tpu.dot_dimension_numbers<[1], [0], [0], [1], [0, 0, 1, 1], [], []>} : vector<8x128xbf16>, vector<128x128xbf16>, vector<8x128xf32> -> vector<8x128xf32>
    %107 = arith.addf %106, %12 : vector<8x128xf32>
    %cst_47 = arith.constant 1.000000e+00 : f32
    %108 = vector.broadcast %cst_47 : f32 to vector<8x128xf32>
    %109 = arith.cmpf ogt, %61, %108 : vector<8x128xf32>
    %110 = arith.extui %109 : vector<8x128xi1> to vector<8x128xi32>
    %111 = arith.sitofp %110 : vector<8x128xi32> to vector<8x128xf32>
    %cst_48 = arith.constant 0.899999976 : f32
    %112 = vector.broadcast %cst_48 : f32 to vector<8x128xf32>
    %113 = arith.mulf %112, %61 : vector<8x128xf32>
    %114 = arith.addf %113, %107 : vector<8x128xf32>
    %cst_49 = arith.constant 1.000000e+00 : f32
    %115 = vector.broadcast %cst_49 : f32 to vector<8x128xf32>
    %116 = arith.mulf %111, %115 : vector<8x128xf32>
    %117 = arith.subf %114, %116 : vector<8x128xf32>
    %cst_50 = arith.constant 1.000000e+00 : f32
    %118 = vector.broadcast %cst_50 : f32 to vector<8x128xf32>
    %119 = arith.cmpf ogt, %117, %118 : vector<8x128xf32>
    %120 = arith.extui %119 : vector<8x128xi1> to vector<8x128xi32>
    %121 = arith.sitofp %120 : vector<8x128xi32> to vector<8x128xf32>
    %c1 = arith.constant 1 : index
    %c0_51 = arith.constant 0 : index
    %c0_52 = arith.constant 0 : index
    %122 = vector.load %arg8[%c1, %c0_51, %c0_52] : memref<5x8x128xf32, #tpu.memory_space<vmem>>, vector<1x8x128xf32>
    %123 = vector.shape_cast %122 : vector<1x8x128xf32> to vector<8x128xf32>
    %124 = vector.shape_cast %121 : vector<8x128xf32> to vector<1x8x128xf32>
    tpu.vector_store %arg8[%c1, %c0_51, %c0_52], %124 {strides = array<i32>} : memref<5x8x128xf32, #tpu.memory_space<vmem>>, vector<1x8x128xf32>,
    %c1_53 = arith.constant 1 : index
    %c0_54 = arith.constant 0 : index
    %c0_55 = arith.constant 0 : index
    %125 = vector.load %arg9[%c1_53, %c0_54, %c0_55] : memref<5x8x128xf32, #tpu.memory_space<vmem>>, vector<1x8x128xf32>
    %126 = vector.shape_cast %125 : vector<1x8x128xf32> to vector<8x128xf32>
    %127 = vector.shape_cast %117 : vector<8x128xf32> to vector<1x8x128xf32>
    tpu.vector_store %arg9[%c1_53, %c0_54, %c0_55], %127 {strides = array<i32>} : memref<5x8x128xf32, #tpu.memory_space<vmem>>, vector<1x8x128xf32>,
    %cst_56 = arith.constant dense<0.000000e+00> : vector<8x256xf32>
    %128 = tpu.matmul %0, %1, %cst_56 {dimension_numbers = #tpu.dot_dimension_numbers<[1], [0], [0], [1], [0, 0, 1, 1], [], []>} : vector<8x896xbf16>, vector<896x256xbf16>, vector<8x256xf32> -> vector<8x256xf32>
    %129 = arith.addf %128, %6 : vector<8x256xf32>
    %cst_57 = arith.constant 1.000000e+00 : f32
    %130 = vector.broadcast %cst_57 : f32 to vector<8x256xf32>
    %131 = arith.cmpf ogt, %83, %130 : vector<8x256xf32>
    %132 = arith.extui %131 : vector<8x256xi1> to vector<8x256xi32>
    %133 = arith.sitofp %132 : vector<8x256xi32> to vector<8x256xf32>
    %cst_58 = arith.constant 0.899999976 : f32
    %134 = vector.broadcast %cst_58 : f32 to vector<8x256xf32>
    %135 = arith.mulf %134, %83 : vector<8x256xf32>
    %136 = arith.addf %135, %129 : vector<8x256xf32>
    %cst_59 = arith.constant 1.000000e+00 : f32
    %137 = vector.broadcast %cst_59 : f32 to vector<8x256xf32>
    %138 = arith.mulf %133, %137 : vector<8x256xf32>
    %139 = arith.subf %136, %138 : vector<8x256xf32>
    %cst_60 = arith.constant 1.000000e+00 : f32
    %140 = vector.broadcast %cst_60 : f32 to vector<8x256xf32>
    %141 = arith.cmpf ogt, %139, %140 : vector<8x256xf32>
    %142 = arith.extui %141 : vector<8x256xi1> to vector<8x256xi32>
    %143 = arith.sitofp %142 : vector<8x256xi32> to vector<8x256xf32>
    %144 = arith.truncf %143 : vector<8x256xf32> to vector<8x256xbf16>
    %cst_61 = arith.constant dense<0.000000e+00> : vector<8x128xf32>
    %145 = tpu.matmul %144, %2, %cst_61 {dimension_numbers = #tpu.dot_dimension_numbers<[1], [0], [0], [1], [0, 0, 1, 1], [], []>} : vector<8x256xbf16>, vector<256x128xbf16>, vector<8x128xf32> -> vector<8x128xf32>
    %146 = arith.addf %145, %9 : vector<8x128xf32>
    %cst_62 = arith.constant 1.000000e+00 : f32
    %147 = vector.broadcast %cst_62 : f32 to vector<8x128xf32>
    %148 = arith.cmpf ogt, %100, %147 : vector<8x128xf32>
    %149 = arith.extui %148 : vector<8x128xi1> to vector<8x128xi32>
    %150 = arith.sitofp %149 : vector<8x128xi32> to vector<8x128xf32>
    %cst_63 = arith.constant 0.899999976 : f32
    %151 = vector.broadcast %cst_63 : f32 to vector<8x128xf32>
    %152 = arith.mulf %151, %100 : vector<8x128xf32>
    %153 = arith.addf %152, %146 : vector<8x128xf32>
    %cst_64 = arith.constant 1.000000e+00 : f32
    %154 = vector.broadcast %cst_64 : f32 to vector<8x128xf32>
    %155 = arith.mulf %150, %154 : vector<8x128xf32>
    %156 = arith.subf %153, %155 : vector<8x128xf32>
    %cst_65 = arith.constant 1.000000e+00 : f32
    %157 = vector.broadcast %cst_65 : f32 to vector<8x128xf32>
    %158 = arith.cmpf ogt, %156, %157 : vector<8x128xf32>
    %159 = arith.extui %158 : vector<8x128xi1> to vector<8x128xi32>
    %160 = arith.sitofp %159 : vector<8x128xi32> to vector<8x128xf32>
    %161 = arith.truncf %160 : vector<8x128xf32> to vector<8x128xbf16>
    %cst_66 = arith.constant dense<0.000000e+00> : vector<8x128xf32>
    %162 = tpu.matmul %161, %3, %cst_66 {dimension_numbers = #tpu.dot_dimension_numbers<[1], [0], [0], [1], [0, 0, 1, 1], [], []>} : vector<8x128xbf16>, vector<128x128xbf16>, vector<8x128xf32> -> vector<8x128xf32>
    %163 = arith.addf %162, %12 : vector<8x128xf32>
    %cst_67 = arith.constant 1.000000e+00 : f32
    %164 = vector.broadcast %cst_67 : f32 to vector<8x128xf32>
    %165 = arith.cmpf ogt, %117, %164 : vector<8x128xf32>
    %166 = arith.extui %165 : vector<8x128xi1> to vector<8x128xi32>
    %167 = arith.sitofp %166 : vector<8x128xi32> to vector<8x128xf32>
    %cst_68 = arith.constant 0.899999976 : f32
    %168 = vector.broadcast %cst_68 : f32 to vector<8x128xf32>
    %169 = arith.mulf %168, %117 : vector<8x128xf32>
    %170 = arith.addf %169, %163 : vector<8x128xf32>
    %cst_69 = arith.constant 1.000000e+00 : f32
    %171 = vector.broadcast %cst_69 : f32 to vector<8x128xf32>
    %172 = arith.mulf %167, %171 : vector<8x128xf32>
    %173 = arith.subf %170, %172 : vector<8x128xf32>
    %cst_70 = arith.constant 1.000000e+00 : f32
    %174 = vector.broadcast %cst_70 : f32 to vector<8x128xf32>
    %175 = arith.cmpf ogt, %173, %174 : vector<8x128xf32>
    %176 = arith.extui %175 : vector<8x128xi1> to vector<8x128xi32>
    %177 = arith.sitofp %176 : vector<8x128xi32> to vector<8x128xf32>
    %c2 = arith.constant 2 : index
    %c0_71 = arith.constant 0 : index
    %c0_72 = arith.constant 0 : index
    %178 = vector.load %arg8[%c2, %c0_71, %c0_72] : memref<5x8x128xf32, #tpu.memory_space<vmem>>, vector<1x8x128xf32>
    %179 = vector.shape_cast %178 : vector<1x8x128xf32> to vector<8x128xf32>
    %180 = vector.shape_cast %177 : vector<8x128xf32> to vector<1x8x128xf32>
    tpu.vector_store %arg8[%c2, %c0_71, %c0_72], %180 {strides = array<i32>} : memref<5x8x128xf32, #tpu.memory_space<vmem>>, vector<1x8x128xf32>,
    %c2_73 = arith.constant 2 : index
    %c0_74 = arith.constant 0 : index
    %c0_75 = arith.constant 0 : index
    %181 = vector.load %arg9[%c2_73, %c0_74, %c0_75] : memref<5x8x128xf32, #tpu.memory_space<vmem>>, vector<1x8x128xf32>
    %182 = vector.shape_cast %181 : vector<1x8x128xf32> to vector<8x128xf32>
    %183 = vector.shape_cast %173 : vector<8x128xf32> to vector<1x8x128xf32>
    tpu.vector_store %arg9[%c2_73, %c0_74, %c0_75], %183 {strides = array<i32>} : memref<5x8x128xf32, #tpu.memory_space<vmem>>, vector<1x8x128xf32>,
    %cst_76 = arith.constant dense<0.000000e+00> : vector<8x256xf32>
    %184 = tpu.matmul %0, %1, %cst_76 {dimension_numbers = #tpu.dot_dimension_numbers<[1], [0], [0], [1], [0, 0, 1, 1], [], []>} : vector<8x896xbf16>, vector<896x256xbf16>, vector<8x256xf32> -> vector<8x256xf32>
    %185 = arith.addf %184, %6 : vector<8x256xf32>
    %cst_77 = arith.constant 1.000000e+00 : f32
    %186 = vector.broadcast %cst_77 : f32 to vector<8x256xf32>
    %187 = arith.cmpf ogt, %139, %186 : vector<8x256xf32>
    %188 = arith.extui %187 : vector<8x256xi1> to vector<8x256xi32>
    %189 = arith.sitofp %188 : vector<8x256xi32> to vector<8x256xf32>
    %cst_78 = arith.constant 0.899999976 : f32
    %190 = vector.broadcast %cst_78 : f32 to vector<8x256xf32>
    %191 = arith.mulf %190, %139 : vector<8x256xf32>
    %192 = arith.addf %191, %185 : vector<8x256xf32>
    %cst_79 = arith.constant 1.000000e+00 : f32
    %193 = vector.broadcast %cst_79 : f32 to vector<8x256xf32>
    %194 = arith.mulf %189, %193 : vector<8x256xf32>
    %195 = arith.subf %192, %194 : vector<8x256xf32>
    %cst_80 = arith.constant 1.000000e+00 : f32
    %196 = vector.broadcast %cst_80 : f32 to vector<8x256xf32>
    %197 = arith.cmpf ogt, %195, %196 : vector<8x256xf32>
    %198 = arith.extui %197 : vector<8x256xi1> to vector<8x256xi32>
    %199 = arith.sitofp %198 : vector<8x256xi32> to vector<8x256xf32>
    %200 = arith.truncf %199 : vector<8x256xf32> to vector<8x256xbf16>
    %cst_81 = arith.constant dense<0.000000e+00> : vector<8x128xf32>
    %201 = tpu.matmul %200, %2, %cst_81 {dimension_numbers = #tpu.dot_dimension_numbers<[1], [0], [0], [1], [0, 0, 1, 1], [], []>} : vector<8x256xbf16>, vector<256x128xbf16>, vector<8x128xf32> -> vector<8x128xf32>
    %202 = arith.addf %201, %9 : vector<8x128xf32>
    %cst_82 = arith.constant 1.000000e+00 : f32
    %203 = vector.broadcast %cst_82 : f32 to vector<8x128xf32>
    %204 = arith.cmpf ogt, %156, %203 : vector<8x128xf32>
    %205 = arith.extui %204 : vector<8x128xi1> to vector<8x128xi32>
    %206 = arith.sitofp %205 : vector<8x128xi32> to vector<8x128xf32>
    %cst_83 = arith.constant 0.899999976 : f32
    %207 = vector.broadcast %cst_83 : f32 to vector<8x128xf32>
    %208 = arith.mulf %207, %156 : vector<8x128xf32>
    %209 = arith.addf %208, %202 : vector<8x128xf32>
    %cst_84 = arith.constant 1.000000e+00 : f32
    %210 = vector.broadcast %cst_84 : f32 to vector<8x128xf32>
    %211 = arith.mulf %206, %210 : vector<8x128xf32>
    %212 = arith.subf %209, %211 : vector<8x128xf32>
    %cst_85 = arith.constant 1.000000e+00 : f32
    %213 = vector.broadcast %cst_85 : f32 to vector<8x128xf32>
    %214 = arith.cmpf ogt, %212, %213 : vector<8x128xf32>
    %215 = arith.extui %214 : vector<8x128xi1> to vector<8x128xi32>
    %216 = arith.sitofp %215 : vector<8x128xi32> to vector<8x128xf32>
    %217 = arith.truncf %216 : vector<8x128xf32> to vector<8x128xbf16>
    %cst_86 = arith.constant dense<0.000000e+00> : vector<8x128xf32>
    %218 = tpu.matmul %217, %3, %cst_86 {dimension_numbers = #tpu.dot_dimension_numbers<[1], [0], [0], [1], [0, 0, 1, 1], [], []>} : vector<8x128xbf16>, vector<128x128xbf16>, vector<8x128xf32> -> vector<8x128xf32>
    %219 = arith.addf %218, %12 : vector<8x128xf32>
    %cst_87 = arith.constant 1.000000e+00 : f32
    %220 = vector.broadcast %cst_87 : f32 to vector<8x128xf32>
    %221 = arith.cmpf ogt, %173, %220 : vector<8x128xf32>
    %222 = arith.extui %221 : vector<8x128xi1> to vector<8x128xi32>
    %223 = arith.sitofp %222 : vector<8x128xi32> to vector<8x128xf32>
    %cst_88 = arith.constant 0.899999976 : f32
    %224 = vector.broadcast %cst_88 : f32 to vector<8x128xf32>
    %225 = arith.mulf %224, %173 : vector<8x128xf32>
    %226 = arith.addf %225, %219 : vector<8x128xf32>
    %cst_89 = arith.constant 1.000000e+00 : f32
    %227 = vector.broadcast %cst_89 : f32 to vector<8x128xf32>
    %228 = arith.mulf %223, %227 : vector<8x128xf32>
    %229 = arith.subf %226, %228 : vector<8x128xf32>
    %cst_90 = arith.constant 1.000000e+00 : f32
    %230 = vector.broadcast %cst_90 : f32 to vector<8x128xf32>
    %231 = arith.cmpf ogt, %229, %230 : vector<8x128xf32>
    %232 = arith.extui %231 : vector<8x128xi1> to vector<8x128xi32>
    %233 = arith.sitofp %232 : vector<8x128xi32> to vector<8x128xf32>
    %c3 = arith.constant 3 : index
    %c0_91 = arith.constant 0 : index
    %c0_92 = arith.constant 0 : index
    %234 = vector.load %arg8[%c3, %c0_91, %c0_92] : memref<5x8x128xf32, #tpu.memory_space<vmem>>, vector<1x8x128xf32>
    %235 = vector.shape_cast %234 : vector<1x8x128xf32> to vector<8x128xf32>
    %236 = vector.shape_cast %233 : vector<8x128xf32> to vector<1x8x128xf32>
    tpu.vector_store %arg8[%c3, %c0_91, %c0_92], %236 {strides = array<i32>} : memref<5x8x128xf32, #tpu.memory_space<vmem>>, vector<1x8x128xf32>,
    %c3_93 = arith.constant 3 : index
    %c0_94 = arith.constant 0 : index
    %c0_95 = arith.constant 0 : index
    %237 = vector.load %arg9[%c3_93, %c0_94, %c0_95] : memref<5x8x128xf32, #tpu.memory_space<vmem>>, vector<1x8x128xf32>
    %238 = vector.shape_cast %237 : vector<1x8x128xf32> to vector<8x128xf32>
    %239 = vector.shape_cast %229 : vector<8x128xf32> to vector<1x8x128xf32>
    tpu.vector_store %arg9[%c3_93, %c0_94, %c0_95], %239 {strides = array<i32>} : memref<5x8x128xf32, #tpu.memory_space<vmem>>, vector<1x8x128xf32>,
    %cst_96 = arith.constant dense<0.000000e+00> : vector<8x256xf32>
    %240 = tpu.matmul %0, %1, %cst_96 {dimension_numbers = #tpu.dot_dimension_numbers<[1], [0], [0], [1], [0, 0, 1, 1], [], []>} : vector<8x896xbf16>, vector<896x256xbf16>, vector<8x256xf32> -> vector<8x256xf32>
    %241 = arith.addf %240, %6 : vector<8x256xf32>
    %cst_97 = arith.constant 1.000000e+00 : f32
    %242 = vector.broadcast %cst_97 : f32 to vector<8x256xf32>
    %243 = arith.cmpf ogt, %195, %242 : vector<8x256xf32>
    %244 = arith.extui %243 : vector<8x256xi1> to vector<8x256xi32>
    %245 = arith.sitofp %244 : vector<8x256xi32> to vector<8x256xf32>
    %cst_98 = arith.constant 0.899999976 : f32
    %246 = vector.broadcast %cst_98 : f32 to vector<8x256xf32>
    %247 = arith.mulf %246, %195 : vector<8x256xf32>
    %248 = arith.addf %247, %241 : vector<8x256xf32>
    %cst_99 = arith.constant 1.000000e+00 : f32
    %249 = vector.broadcast %cst_99 : f32 to vector<8x256xf32>
    %250 = arith.mulf %245, %249 : vector<8x256xf32>
    %251 = arith.subf %248, %250 : vector<8x256xf32>
    %cst_100 = arith.constant 1.000000e+00 : f32
    %252 = vector.broadcast %cst_100 : f32 to vector<8x256xf32>
    %253 = arith.cmpf ogt, %251, %252 : vector<8x256xf32>
    %254 = arith.extui %253 : vector<8x256xi1> to vector<8x256xi32>
    %255 = arith.sitofp %254 : vector<8x256xi32> to vector<8x256xf32>
    %256 = arith.truncf %255 : vector<8x256xf32> to vector<8x256xbf16>
    %cst_101 = arith.constant dense<0.000000e+00> : vector<8x128xf32>
    %257 = tpu.matmul %256, %2, %cst_101 {dimension_numbers = #tpu.dot_dimension_numbers<[1], [0], [0], [1], [0, 0, 1, 1], [], []>} : vector<8x256xbf16>, vector<256x128xbf16>, vector<8x128xf32> -> vector<8x128xf32>
    %258 = arith.addf %257, %9 : vector<8x128xf32>
    %cst_102 = arith.constant 1.000000e+00 : f32
    %259 = vector.broadcast %cst_102 : f32 to vector<8x128xf32>
    %260 = arith.cmpf ogt, %212, %259 : vector<8x128xf32>
    %261 = arith.extui %260 : vector<8x128xi1> to vector<8x128xi32>
    %262 = arith.sitofp %261 : vector<8x128xi32> to vector<8x128xf32>
    %cst_103 = arith.constant 0.899999976 : f32
    %263 = vector.broadcast %cst_103 : f32 to vector<8x128xf32>
    %264 = arith.mulf %263, %212 : vector<8x128xf32>
    %265 = arith.addf %264, %258 : vector<8x128xf32>
    %cst_104 = arith.constant 1.000000e+00 : f32
    %266 = vector.broadcast %cst_104 : f32 to vector<8x128xf32>
    %267 = arith.mulf %262, %266 : vector<8x128xf32>
    %268 = arith.subf %265, %267 : vector<8x128xf32>
    %cst_105 = arith.constant 1.000000e+00 : f32
    %269 = vector.broadcast %cst_105 : f32 to vector<8x128xf32>
    %270 = arith.cmpf ogt, %268, %269 : vector<8x128xf32>
    %271 = arith.extui %270 : vector<8x128xi1> to vector<8x128xi32>
    %272 = arith.sitofp %271 : vector<8x128xi32> to vector<8x128xf32>
    %273 = arith.truncf %272 : vector<8x128xf32> to vector<8x128xbf16>
    %cst_106 = arith.constant dense<0.000000e+00> : vector<8x128xf32>
    %274 = tpu.matmul %273, %3, %cst_106 {dimension_numbers = #tpu.dot_dimension_numbers<[1], [0], [0], [1], [0, 0, 1, 1], [], []>} : vector<8x128xbf16>, vector<128x128xbf16>, vector<8x128xf32> -> vector<8x128xf32>
    %275 = arith.addf %274, %12 : vector<8x128xf32>
    %cst_107 = arith.constant 1.000000e+00 : f32
    %276 = vector.broadcast %cst_107 : f32 to vector<8x128xf32>
    %277 = arith.cmpf ogt, %229, %276 : vector<8x128xf32>
    %278 = arith.extui %277 : vector<8x128xi1> to vector<8x128xi32>
    %279 = arith.sitofp %278 : vector<8x128xi32> to vector<8x128xf32>
    %cst_108 = arith.constant 0.899999976 : f32
    %280 = vector.broadcast %cst_108 : f32 to vector<8x128xf32>
    %281 = arith.mulf %280, %229 : vector<8x128xf32>
    %282 = arith.addf %281, %275 : vector<8x128xf32>
    %cst_109 = arith.constant 1.000000e+00 : f32
    %283 = vector.broadcast %cst_109 : f32 to vector<8x128xf32>
    %284 = arith.mulf %279, %283 : vector<8x128xf32>
    %285 = arith.subf %282, %284 : vector<8x128xf32>
    %cst_110 = arith.constant 1.000000e+00 : f32
    %286 = vector.broadcast %cst_110 : f32 to vector<8x128xf32>
    %287 = arith.cmpf ogt, %285, %286 : vector<8x128xf32>
    %288 = arith.extui %287 : vector<8x128xi1> to vector<8x128xi32>
    %289 = arith.sitofp %288 : vector<8x128xi32> to vector<8x128xf32>
    %c4 = arith.constant 4 : index
    %c0_111 = arith.constant 0 : index
    %c0_112 = arith.constant 0 : index
    %290 = vector.load %arg8[%c4, %c0_111, %c0_112] : memref<5x8x128xf32, #tpu.memory_space<vmem>>, vector<1x8x128xf32>
    %291 = vector.shape_cast %290 : vector<1x8x128xf32> to vector<8x128xf32>
    %292 = vector.shape_cast %289 : vector<8x128xf32> to vector<1x8x128xf32>
    tpu.vector_store %arg8[%c4, %c0_111, %c0_112], %292 {strides = array<i32>} : memref<5x8x128xf32, #tpu.memory_space<vmem>>, vector<1x8x128xf32>,
    %c4_113 = arith.constant 4 : index
    %c0_114 = arith.constant 0 : index
    %c0_115 = arith.constant 0 : index
    %293 = vector.load %arg9[%c4_113, %c0_114, %c0_115] : memref<5x8x128xf32, #tpu.memory_space<vmem>>, vector<1x8x128xf32>
    %294 = vector.shape_cast %293 : vector<1x8x128xf32> to vector<8x128xf32>
    %295 = vector.shape_cast %285 : vector<8x128xf32> to vector<1x8x128xf32>
    tpu.vector_store %arg9[%c4_113, %c0_114, %c0_115], %295 {strides = array<i32>} : memref<5x8x128xf32, #tpu.memory_space<vmem>>, vector<1x8x128xf32>,
    return
  }
  func.func @transform_0(%arg0: i32) -> (i32, i32) {
    %c0_i32 = arith.constant 0 : i32
    %c0_i32_0 = arith.constant 0 : i32
    return %arg0, %c0_i32 : i32, i32
  }
  func.func @transform_1(%arg0: i32) -> (i32, i32) {
    %c0_i32 = arith.constant 0 : i32
    %c0_i32_0 = arith.constant 0 : i32
    %c0_i32_1 = arith.constant 0 : i32
    return %c0_i32, %c0_i32_0 : i32, i32
  }
  func.func @transform_2(%arg0: i32) -> (i32, i32) {
    %c0_i32 = arith.constant 0 : i32
    %c0_i32_0 = arith.constant 0 : i32
    %c0_i32_1 = arith.constant 0 : i32
    return %c0_i32, %c0_i32_0 : i32, i32
  }
  func.func @transform_3(%arg0: i32) -> (i32, i32) {
    %c0_i32 = arith.constant 0 : i32
    %c0_i32_0 = arith.constant 0 : i32
    %c0_i32_1 = arith.constant 0 : i32
    return %c0_i32, %c0_i32_0 : i32, i32
  }
  func.func @transform_4(%arg0: i32) -> (i32, i32) {
    %c0_i32 = arith.constant 0 : i32
    %c0_i32_0 = arith.constant 0 : i32
    %c0_i32_1 = arith.constant 0 : i32
    return %c0_i32, %c0_i32_0 : i32, i32
  }
  func.func @transform_5(%arg0: i32) -> (i32, i32) {
    %c0_i32 = arith.constant 0 : i32
    %c0_i32_0 = arith.constant 0 : i32
    %c0_i32_1 = arith.constant 0 : i32
    return %c0_i32, %c0_i32_0 : i32, i32
  }
  func.func @transform_6(%arg0: i32) -> (i32, i32) {
    %c0_i32 = arith.constant 0 : i32
    %c0_i32_0 = arith.constant 0 : i32
    %c0_i32_1 = arith.constant 0 : i32
    return %c0_i32, %c0_i32_0 : i32, i32
  }
  func.func @transform_7(%arg0: i32) -> (i32, i32, i32) {
    %c0_i32 = arith.constant 0 : i32
    %c0_i32_0 = arith.constant 0 : i32
    %c0_i32_1 = arith.constant 0 : i32
    return %c0_i32, %arg0, %c0_i32_0 : i32, i32, i32
  }
  func.func @transform_8(%arg0: i32) -> (i32, i32, i32) {
    %c0_i32 = arith.constant 0 : i32
    %c0_i32_0 = arith.constant 0 : i32
    %c0_i32_1 = arith.constant 0 : i32
    return %c0_i32, %arg0, %c0_i32_0 : i32, i32, i32
  }
}

</mosaic_0001>

<llo_original>
// kernel: netfc_forward.1
$region0: #{netfc_forward.1}
  #allocation0 [shape = 'u32[]', space=smem, size = 0x4, offset = 0x4, fixed_abs, tag = 'smem constant byte address 0x4 - core index']
  #allocation1 [shape = 'u32[144,128]{1,0:T(1,128)}', space=vmem, size = 0x12000, scoped, tag = 'internal scratch']
  %s0 = inlined_call_operand.vmem [shape: bf16[8,896], index: 0, kind: input, shape index: {}]
  %s1 = inlined_call_operand.vmem [shape: bf16[896,256], index: 1, kind: input, shape index: {}]
  %s2 = inlined_call_operand.vmem [shape: f32[1,256], index: 2, kind: input, shape index: {}]
  %s3 = inlined_call_operand.vmem [shape: bf16[256,128], index: 3, kind: input, shape index: {}]
  %s4 = inlined_call_operand.vmem [shape: f32[1,128], index: 4, kind: input, shape index: {}]
  %s5 = inlined_call_operand.vmem [shape: bf16[128,128], index: 5, kind: input, shape index: {}]
  %s6 = inlined_call_operand.vmem [shape: f32[1,128], index: 6, kind: input, shape index: {}]
  %s7 = inlined_call_operand.vmem [shape: f32[5,8,128], index: 7, kind: output, shape index: {0}]
  %s8 = inlined_call_operand.vmem [shape: f32[5,8,128], index: 8, kind: output, shape index: {1}]
  %9 = xla_tuple %s7, %s8
  %s10 = sld [smem:[#allocation0]]
  $region46: #{netfc_forward.1} parent=0
    _
  %s12 = ssub.s32 1, %s10
  %s13 = scalar_select 0, %s12, %s10
  // Predicated region
  $region2: #{netfc_forward.1} parent=0 // pred_check
    _
  $region3: #{netfc_forward.1} parent=0 // pred_check_branch
    %15 = sbr.rel (0) target = $region5
  $region4: #{netfc_forward.1} parent=0 // pred_region
    _
  $region5: #{netfc_forward.1} parent=0 // pred_fallthru
    _
  // Predicated region
  $region6: #{netfc_forward.1} parent=0 // pred_check
    _
  $region7: #{netfc_forward.1} parent=0 // pred_check_branch
    %17 = sbr.rel (0) target = $region9
  $region8: #{netfc_forward.1} parent=0 // pred_region
    _
  $region9: #{netfc_forward.1} parent=0 // pred_fallthru
    _
  // Predicated region
  $region10: #{netfc_forward.1} parent=0 // pred_check
    _
  $region11: #{netfc_forward.1} parent=0 // pred_check_branch
    %19 = sbr.rel (0) target = $region13
  $region12: #{netfc_forward.1} parent=0 // pred_region
    _
  $region13: #{netfc_forward.1} parent=0 // pred_fallthru
    _
  // Predicated region
  $region14: #{netfc_forward.1} parent=0 // pred_check
    _
  $region15: #{netfc_forward.1} parent=0 // pred_check_branch
    %21 = sbr.rel (0) target = $region17
  $region16: #{netfc_forward.1} parent=0 // pred_region
    _
  $region17: #{netfc_forward.1} parent=0 // pred_fallthru
    _
  // Predicated region
  $region18: #{netfc_forward.1} parent=0 // pred_check
    _
  $region19: #{netfc_forward.1} parent=0 // pred_check_branch
    %23 = sbr.rel (0) target = $region21
  $region20: #{netfc_forward.1} parent=0 // pred_region
    _
  $region21: #{netfc_forward.1} parent=0 // pred_fallthru
    _
  // Predicated region
  $region22: #{netfc_forward.1} parent=0 // pred_check
    _
  $region23: #{netfc_forward.1} parent=0 // pred_check_branch
    %25 = sbr.rel (0) target = $region25
  $region24: #{netfc_forward.1} parent=0 // pred_region
    _
  $region25: #{netfc_forward.1} parent=0 // pred_fallthru
    _
  // Predicated region
  $region26: #{netfc_forward.1} parent=0 // pred_check
    _
  $region27: #{netfc_forward.1} parent=0 // pred_check_branch
    %27 = sbr.rel (0) target = $region29
  $region28: #{netfc_forward.1} parent=0 // pred_region
    _
  $region29: #{netfc_forward.1} parent=0 // pred_fallthru
    _
  %v29 = vld [vmem:[%s0] sm:$0xff]
  %v30 = vld [vmem:[%s0 + $0x8] sm:$0xff]
  %v31 = vld [vmem:[%s0 + $0x10] sm:$0xff]
  %v32 = vld [vmem:[%s0 + $0x18] sm:$0xf]
  %v33 = vld [vmem:[%s1] sm:$0xff]
  %v34 = vld [vmem:[%s1 + $0x8] sm:$0xff]
  %v35 = vld [vmem:[%s1 + $0x10] sm:$0xff]
  %v36 = vld [vmem:[%s1 + $0x18] sm:$0xff]
  %v37 = vld [vmem:[%s1 + $0x20] sm:$0xff]
  %v38 = vld [vmem:[%s1 + $0x28] sm:$0xff]
  %v39 = vld [vmem:[%s1 + $0x30] sm:$0xff]
  %v40 = vld [vmem:[%s1 + $0x38] sm:$0xff]
  %v41 = vld [vmem:[%s1 + $0x40] sm:$0xff]
  %v42 = vld [vmem:[%s1 + $0x48] sm:$0xff]
  %v43 = vld [vmem:[%s1 + $0x50] sm:$0xff]
  %v44 = vld [vmem:[%s1 + $0x58] sm:$0xff]
  %v45 = vld [vmem:[%s1 + $0x60] sm:$0xff]
  %v46 = vld [vmem:[%s1 + $0x68] sm:$0xff]
  %v47 = vld [vmem:[%s1 + $0x70] sm:$0xff]
  %v48 = vld [vmem:[%s1 + $0x78] sm:$0xff]
  %v49 = vld [vmem:[%s1 + $0x80] sm:$0xff]
  %v50 = vld [vmem:[%s1 + $0x88] sm:$0xff]
  %v51 = vld [vmem:[%s1 + $0x90] sm:$0xff]
  %v52 = vld [vmem:[%s1 + $0x98] sm:$0xff]
  %v53 = vld [vmem:[%s1 + $0xa0] sm:$0xff]
  %v54 = vld [vmem:[%s1 + $0xa8] sm:$0xff]
  %v55 = vld [vmem:[%s1 + $0xb0] sm:$0xff]
  %v56 = vld [vmem:[%s1 + $0xb8] sm:$0xff]
  %v57 = vld [vmem:[%s1 + $0xc0] sm:$0xff]
  %v58 = vld [vmem:[%s1 + $0xc8] sm:$0xff]
  %v59 = vld [vmem:[%s1 + $0xd0] sm:$0xff]
  %v60 = vld [vmem:[%s1 + $0xd8] sm:$0xff]
  %v61 = vld [vmem:[%s1 + $0xe0] sm:$0xff]
  %v62 = vld [vmem:[%s1 + $0xe8] sm:$0xff]
  %v63 = vld [vmem:[%s1 + $0xf0] sm:$0xff]
  %v64 = vld [vmem:[%s1 + $0xf8] sm:$0xff]
  %v65 = vld [vmem:[%s1 + $0x100] sm:$0xff]
  %v66 = vld [vmem:[%s1 + $0x108] sm:$0xff]
  %v67 = vld [vmem:[%s1 + $0x110] sm:$0xff]
  %v68 = vld [vmem:[%s1 + $0x118] sm:$0xff]
  %v69 = vld [vmem:[%s1 + $0x120] sm:$0xff]
  %v70 = vld [vmem:[%s1 + $0x128] sm:$0xff]
  %v71 = vld [vmem:[%s1 + $0x130] sm:$0xff]
  %v72 = vld [vmem:[%s1 + $0x138] sm:$0xff]
  %v73 = vld [vmem:[%s1 + $0x140] sm:$0xff]
  %v74 = vld [vmem:[%s1 + $0x148] sm:$0xff]
  %v75 = vld [vmem:[%s1 + $0x150] sm:$0xff]
  %v76 = vld [vmem:[%s1 + $0x158] sm:$0xff]
  %v77 = vld [vmem:[%s1 + $0x160] sm:$0xff]
  %v78 = vld [vmem:[%s1 + $0x168] sm:$0xff]
  %v79 = vld [vmem:[%s1 + $0x170] sm:$0xff]
  %v80 = vld [vmem:[%s1 + $0x178] sm:$0xff]
  %v81 = vld [vmem:[%s1 + $0x180] sm:$0xff]
  %v82 = vld [vmem:[%s1 + $0x188] sm:$0xff]
  %v83 = vld [vmem:[%s1 + $0x190] sm:$0xff]
  %v84 = vld [vmem:[%s1 + $0x198] sm:$0xff]
  %v85 = vld [vmem:[%s1 + $0x1a0] sm:$0xff]
  %v86 = vld [vmem:[%s1 + $0x1a8] sm:$0xff]
  %v87 = vld [vmem:[%s1 + $0x1b0] sm:$0xff]
  %v88 = vld [vmem:[%s1 + $0x1b8] sm:$0xff]
  %v89 = vld [vmem:[%s1 + $0x1c0] sm:$0xff]
  %v90 = vld [vmem:[%s1 + $0x1c8] sm:$0xff]
  %v91 = vld [vmem:[%s1 + $0x1d0] sm:$0xff]
  %v92 = vld [vmem:[%s1 + $0x1d8] sm:$0xff]
  %v93 = vld [vmem:[%s1 + $0x1e0] sm:$0xff]
  %v94 = vld [vmem:[%s1 + $0x1e8] sm:$0xff]
  %v95 = vld [vmem:[%s1 + $0x1f0] sm:$0xff]
  %v96 = vld [vmem:[%s1 + $0x1f8] sm:$0xff]
  %v97 = vld [vmem:[%s1 + $0x200] sm:$0xff]
  %v98 = vld [vmem:[%s1 + $0x208] sm:$0xff]
  %v99 = vld [vmem:[%s1 + $0x210] sm:$0xff]
  %v100 = vld [vmem:[%s1 + $0x218] sm:$0xff]
  %v101 = vld [vmem:[%s1 + $0x220] sm:$0xff]
  %v102 = vld [vmem:[%s1 + $0x228] sm:$0xff]
  %v103 = vld [vmem:[%s1 + $0x230] sm:$0xff]
  %v104 = vld [vmem:[%s1 + $0x238] sm:$0xff]
  %v105 = vld [vmem:[%s1 + $0x240] sm:$0xff]
  %v106 = vld [vmem:[%s1 + $0x248] sm:$0xff]
  %v107 = vld [vmem:[%s1 + $0x250] sm:$0xff]
  %v108 = vld [vmem:[%s1 + $0x258] sm:$0xff]
  %v109 = vld [vmem:[%s1 + $0x260] sm:$0xff]
  %v110 = vld [vmem:[%s1 + $0x268] sm:$0xff]
  %v111 = vld [vmem:[%s1 + $0x270] sm:$0xff]
  %v112 = vld [vmem:[%s1 + $0x278] sm:$0xff]
  %v113 = vld [vmem:[%s1 + $0x280] sm:$0xff]
  %v114 = vld [vmem:[%s1 + $0x288] sm:$0xff]
  %v115 = vld [vmem:[%s1 + $0x290] sm:$0xff]
  %v116 = vld [vmem:[%s1 + $0x298] sm:$0xff]
  %v117 = vld [vmem:[%s1 + $0x2a0] sm:$0xff]
  %v118 = vld [vmem:[%s1 + $0x2a8] sm:$0xff]
  %v119 = vld [vmem:[%s1 + $0x2b0] sm:$0xff]
  %v120 = vld [vmem:[%s1 + $0x2b8] sm:$0xff]
  %v121 = vld [vmem:[%s1 + $0x2c0] sm:$0xff]
  %v122 = vld [vmem:[%s1 + $0x2c8] sm:$0xff]
  %v123 = vld [vmem:[%s1 + $0x2d0] sm:$0xff]
  %v124 = vld [vmem:[%s1 + $0x2d8] sm:$0xff]
  %v125 = vld [vmem:[%s1 + $0x2e0] sm:$0xff]
  %v126 = vld [vmem:[%s1 + $0x2e8] sm:$0xff]
  %v127 = vld [vmem:[%s1 + $0x2f0] sm:$0xff]
  %v128 = vld [vmem:[%s1 + $0x2f8] sm:$0xff]
  %v129 = vld [vmem:[%s1 + $0x300] sm:$0xff]
  %v130 = vld [vmem:[%s1 + $0x308] sm:$0xff]
  %v131 = vld [vmem:[%s1 + $0x310] sm:$0xff]
  %v132 = vld [vmem:[%s1 + $0x318] sm:$0xff]
  %v133 = vld [vmem:[%s1 + $0x320] sm:$0xff]
  %v134 = vld [vmem:[%s1 + $0x328] sm:$0xff]
  %v135 = vld [vmem:[%s1 + $0x330] sm:$0xff]
  %v136 = vld [vmem:[%s1 + $0x338] sm:$0xff]
  %v137 = vld [vmem:[%s1 + $0x340] sm:$0xff]
  %v138 = vld [vmem:[%s1 + $0x348] sm:$0xff]
  %v139 = vld [vmem:[%s1 + $0x350] sm:$0xff]
  %v140 = vld [vmem:[%s1 + $0x358] sm:$0xff]
  %v141 = vld [vmem:[%s1 + $0x360] sm:$0xff]
  %v142 = vld [vmem:[%s1 + $0x368] sm:$0xff]
  %v143 = vld [vmem:[%s1 + $0x370] sm:$0xff]
  %v144 = vld [vmem:[%s1 + $0x378] sm:$0xff]
  %v145 = vld [vmem:[%s3] sm:$0xf]
  %v146 = vld [vmem:[%s3 + $0x4] sm:$0xf]
  %v147 = vld [vmem:[%s3 + $0x8] sm:$0xf]
  %v148 = vld [vmem:[%s3 + $0xc] sm:$0xf]
  %v149 = vld [vmem:[%s3 + $0x10] sm:$0xf]
  %v150 = vld [vmem:[%s3 + $0x14] sm:$0xf]
  %v151 = vld [vmem:[%s3 + $0x18] sm:$0xf]
  %v152 = vld [vmem:[%s3 + $0x1c] sm:$0xf]
  %v153 = vld [vmem:[%s3 + $0x20] sm:$0xf]
  %v154 = vld [vmem:[%s3 + $0x24] sm:$0xf]
  %v155 = vld [vmem:[%s3 + $0x28] sm:$0xf]
  %v156 = vld [vmem:[%s3 + $0x2c] sm:$0xf]
  %v157 = vld [vmem:[%s3 + $0x30] sm:$0xf]
  %v158 = vld [vmem:[%s3 + $0x34] sm:$0xf]
  %v159 = vld [vmem:[%s3 + $0x38] sm:$0xf]
  %v160 = vld [vmem:[%s3 + $0x3c] sm:$0xf]
  %v161 = vld [vmem:[%s3 + $0x40] sm:$0xf]
  %v162 = vld [vmem:[%s3 + $0x44] sm:$0xf]
  %v163 = vld [vmem:[%s3 + $0x48] sm:$0xf]
  %v164 = vld [vmem:[%s3 + $0x4c] sm:$0xf]
  %v165 = vld [vmem:[%s3 + $0x50] sm:$0xf]
  %v166 = vld [vmem:[%s3 + $0x54] sm:$0xf]
  %v167 = vld [vmem:[%s3 + $0x58] sm:$0xf]
  %v168 = vld [vmem:[%s3 + $0x5c] sm:$0xf]
  %v169 = vld [vmem:[%s3 + $0x60] sm:$0xf]
  %v170 = vld [vmem:[%s3 + $0x64] sm:$0xf]
  %v171 = vld [vmem:[%s3 + $0x68] sm:$0xf]
  %v172 = vld [vmem:[%s3 + $0x6c] sm:$0xf]
  %v173 = vld [vmem:[%s3 + $0x70] sm:$0xf]
  %v174 = vld [vmem:[%s3 + $0x74] sm:$0xf]
  %v175 = vld [vmem:[%s3 + $0x78] sm:$0xf]
  %v176 = vld [vmem:[%s3 + $0x7c] sm:$0xf]
  %v177 = vld [vmem:[%s5] sm:$0xf]
  %v178 = vld [vmem:[%s5 + $0x4] sm:$0xf]
  %v179 = vld [vmem:[%s5 + $0x8] sm:$0xf]
  %v180 = vld [vmem:[%s5 + $0xc] sm:$0xf]
  %v181 = vld [vmem:[%s5 + $0x10] sm:$0xf]
  %v182 = vld [vmem:[%s5 + $0x14] sm:$0xf]
  %v183 = vld [vmem:[%s5 + $0x18] sm:$0xf]
  %v184 = vld [vmem:[%s5 + $0x1c] sm:$0xf]
  %v185 = vld [vmem:[%s5 + $0x20] sm:$0xf]
  %v186 = vld [vmem:[%s5 + $0x24] sm:$0xf]
  %v187 = vld [vmem:[%s5 + $0x28] sm:$0xf]
  %v188 = vld [vmem:[%s5 + $0x2c] sm:$0xf]
  %v189 = vld [vmem:[%s5 + $0x30] sm:$0xf]
  %v190 = vld [vmem:[%s5 + $0x34] sm:$0xf]
  %v191 = vld [vmem:[%s5 + $0x38] sm:$0xf]
  %v192 = vld [vmem:[%s5 + $0x3c] sm:$0xf]
  %v193 = vld [vmem:[%s2] sm:$0x3]
  %v195 = vlaneseq
  %v196 = vshrl.u32 %v195, 7
  %v197 = vsub.s32 0, %v196
  %v198 = vrot.slane %v193, %v197
  %v199 = vlaneseq
  %v200 = vshrl.u32 %v199, 7
  %v201 = vsub.s32 1, %v200
  %v202 = vrot.slane %v193, %v201
  %v205 = vld [vmem:[%s4] sm:$0x1]
  %v207 = vlaneseq
  %v208 = vshrl.u32 %v207, 7
  %v209 = vsub.s32 0, %v208
  %v210 = vrot.slane %v205, %v209
  %v212 = vld [vmem:[%s6] sm:$0x1]
  %v214 = vlaneseq
  %v215 = vshrl.u32 %v214, 7
  %v216 = vsub.s32 0, %v215
  %v217 = vrot.slane %v212, %v216
  %v223 = vunpack.c.l.b16 %v29
  %v224 = vunpack.c.h.b16 %v29
  %v225 = vunpack.c.l.b16 %v30
  %v226 = vunpack.c.h.b16 %v30
  %v227 = vunpack.c.l.b16 %v31
  %v228 = vunpack.c.h.b16 %v31
  %v229 = vunpack.c.l.b16 %v32
  %v230 = vpack.c.b16 %v223, %v223
  %v231 = vpack.c.b16 %v224, %v224
  %v232 = vpack.c.b16 %v225, %v225
  %v233 = vpack.c.b16 %v226, %v226
  %v234 = vpack.c.b16 %v227, %v227
  %v235 = vpack.c.b16 %v228, %v228
  %v236 = vpack.c.b16 %v229, %v229
  %v356 = vunpack.c.l.b16 %v33
  %v357 = vunpack.c.h.b16 %v33
  %v358 = vunpack.c.l.b16 %v34
  %v359 = vunpack.c.h.b16 %v34
  %v360 = vunpack.c.l.b16 %v35
  %v361 = vunpack.c.h.b16 %v35
  %v362 = vunpack.c.l.b16 %v36
  %v363 = vunpack.c.h.b16 %v36
  %v364 = vunpack.c.l.b16 %v37
  %v365 = vunpack.c.h.b16 %v37
  %v366 = vunpack.c.l.b16 %v38
  %v367 = vunpack.c.h.b16 %v38
  %v368 = vunpack.c.l.b16 %v39
  %v369 = vunpack.c.h.b16 %v39
  %v370 = vunpack.c.l.b16 %v40
  %v371 = vunpack.c.h.b16 %v40
  %v372 = vunpack.c.l.b16 %v41
  %v373 = vunpack.c.h.b16 %v41
  %v374 = vunpack.c.l.b16 %v42
  %v375 = vunpack.c.h.b16 %v42
  %v376 = vunpack.c.l.b16 %v43
  %v377 = vunpack.c.h.b16 %v43
  %v378 = vunpack.c.l.b16 %v44
  %v379 = vunpack.c.h.b16 %v44
  %v380 = vunpack.c.l.b16 %v45
  %v381 = vunpack.c.h.b16 %v45
  %v382 = vunpack.c.l.b16 %v46
  %v383 = vunpack.c.h.b16 %v46
  %v384 = vunpack.c.l.b16 %v47
  %v385 = vunpack.c.h.b16 %v47
  %v386 = vunpack.c.l.b16 %v48
  %v387 = vunpack.c.h.b16 %v48
  %v388 = vunpack.c.l.b16 %v49
  %v389 = vunpack.c.h.b16 %v49
  %v390 = vunpack.c.l.b16 %v50
  %v391 = vunpack.c.h.b16 %v50
  %v392 = vunpack.c.l.b16 %v51
  %v393 = vunpack.c.h.b16 %v51
  %v394 = vunpack.c.l.b16 %v52
  %v395 = vunpack.c.h.b16 %v52
  %v396 = vunpack.c.l.b16 %v53
  %v397 = vunpack.c.h.b16 %v53
  %v398 = vunpack.c.l.b16 %v54
  %v399 = vunpack.c.h.b16 %v54
  %v400 = vunpack.c.l.b16 %v55
  %v401 = vunpack.c.h.b16 %v55
  %v402 = vunpack.c.l.b16 %v56
  %v403 = vunpack.c.h.b16 %v56
  %v404 = vunpack.c.l.b16 %v57
  %v405 = vunpack.c.h.b16 %v57
  %v406 = vunpack.c.l.b16 %v58
  %v407 = vunpack.c.h.b16 %v58
  %v408 = vunpack.c.l.b16 %v59
  %v409 = vunpack.c.h.b16 %v59
  %v410 = vunpack.c.l.b16 %v60
  %v411 = vunpack.c.h.b16 %v60
  %v412 = vunpack.c.l.b16 %v61
  %v413 = vunpack.c.h.b16 %v61
  %v414 = vunpack.c.l.b16 %v62
  %v415 = vunpack.c.h.b16 %v62
  %v416 = vunpack.c.l.b16 %v63
  %v417 = vunpack.c.h.b16 %v63
  %v418 = vunpack.c.l.b16 %v64
  %v419 = vunpack.c.h.b16 %v64
  %v420 = vunpack.c.l.b16 %v65
  %v421 = vunpack.c.h.b16 %v65
  %v422 = vunpack.c.l.b16 %v66
  %v423 = vunpack.c.h.b16 %v66
  %v424 = vunpack.c.l.b16 %v67
  %v425 = vunpack.c.h.b16 %v67
  %v426 = vunpack.c.l.b16 %v68
  %v427 = vunpack.c.h.b16 %v68
  %v428 = vunpack.c.l.b16 %v69
  %v429 = vunpack.c.h.b16 %v69
  %v430 = vunpack.c.l.b16 %v70
  %v431 = vunpack.c.h.b16 %v70
  %v432 = vunpack.c.l.b16 %v71
  %v433 = vunpack.c.h.b16 %v71
  %v434 = vunpack.c.l.b16 %v72
  %v435 = vunpack.c.h.b16 %v72
  %v436 = vunpack.c.l.b16 %v73
  %v437 = vunpack.c.h.b16 %v73
  %v438 = vunpack.c.l.b16 %v74
  %v439 = vunpack.c.h.b16 %v74
  %v440 = vunpack.c.l.b16 %v75
  %v441 = vunpack.c.h.b16 %v75
  %v442 = vunpack.c.l.b16 %v76
  %v443 = vunpack.c.h.b16 %v76
  %v444 = vunpack.c.l.b16 %v77
  %v445 = vunpack.c.h.b16 %v77
  %v446 = vunpack.c.l.b16 %v78
  %v447 = vunpack.c.h.b16 %v78
  %v448 = vunpack.c.l.b16 %v79
  %v449 = vunpack.c.h.b16 %v79
  %v450 = vunpack.c.l.b16 %v80
  %v451 = vunpack.c.h.b16 %v80
  %v452 = vunpack.c.l.b16 %v81
  %v453 = vunpack.c.h.b16 %v81
  %v454 = vunpack.c.l.b16 %v82
  %v455 = vunpack.c.h.b16 %v82
  %v456 = vunpack.c.l.b16 %v83
  %v457 = vunpack.c.h.b16 %v83
  %v458 = vunpack.c.l.b16 %v84
  %v459 = vunpack.c.h.b16 %v84
  %v460 = vunpack.c.l.b16 %v85
  %v461 = vunpack.c.h.b16 %v85
  %v462 = vunpack.c.l.b16 %v86
  %v463 = vunpack.c.h.b16 %v86
  %v464 = vunpack.c.l.b16 %v87
  %v465 = vunpack.c.h.b16 %v87
  %v466 = vunpack.c.l.b16 %v88
  %v467 = vunpack.c.h.b16 %v88
  %v468 = vunpack.c.l.b16 %v89
  %v469 = vunpack.c.h.b16 %v89
  %v470 = vunpack.c.l.b16 %v90
  %v471 = vunpack.c.h.b16 %v90
  %v472 = vunpack.c.l.b16 %v91
  %v473 = vunpack.c.h.b16 %v91
  %v474 = vunpack.c.l.b16 %v92
  %v475 = vunpack.c.h.b16 %v92
  %v476 = vunpack.c.l.b16 %v93
  %v477 = vunpack.c.h.b16 %v93
  %v478 = vunpack.c.l.b16 %v94
  %v479 = vunpack.c.h.b16 %v94
  %v480 = vunpack.c.l.b16 %v95
  %v481 = vunpack.c.h.b16 %v95
  %v482 = vunpack.c.l.b16 %v96
  %v483 = vunpack.c.h.b16 %v96
  %v484 = vunpack.c.l.b16 %v97
  %v485 = vunpack.c.h.b16 %v97
  %v486 = vunpack.c.l.b16 %v98
  %v487 = vunpack.c.h.b16 %v98
  %v488 = vunpack.c.l.b16 %v99
  %v489 = vunpack.c.h.b16 %v99
  %v490 = vunpack.c.l.b16 %v100
  %v491 = vunpack.c.h.b16 %v100
  %v492 = vunpack.c.l.b16 %v101
  %v493 = vunpack.c.h.b16 %v101
  %v494 = vunpack.c.l.b16 %v102
  %v495 = vunpack.c.h.b16 %v102
  %v496 = vunpack.c.l.b16 %v103
  %v497 = vunpack.c.h.b16 %v103
  %v498 = vunpack.c.l.b16 %v104
  %v499 = vunpack.c.h.b16 %v104
  %v500 = vunpack.c.l.b16 %v105
  %v501 = vunpack.c.h.b16 %v105
  %v502 = vunpack.c.l.b16 %v106
  %v503 = vunpack.c.h.b16 %v106
  %v504 = vunpack.c.l.b16 %v107
  %v505 = vunpack.c.h.b16 %v107
  %v506 = vunpack.c.l.b16 %v108
  %v507 = vunpack.c.h.b16 %v108
  %v508 = vunpack.c.l.b16 %v109
  %v509 = vunpack.c.h.b16 %v109
  %v510 = vunpack.c.l.b16 %v110
  %v511 = vunpack.c.h.b16 %v110
  %v512 = vunpack.c.l.b16 %v111
  %v513 = vunpack.c.h.b16 %v111
  %v514 = vunpack.c.l.b16 %v112
  %v515 = vunpack.c.h.b16 %v112
  %v516 = vunpack.c.l.b16 %v113
  %v517 = vunpack.c.h.b16 %v113
  %v518 = vunpack.c.l.b16 %v114
  %v519 = vunpack.c.h.b16 %v114
  %v520 = vunpack.c.l.b16 %v115
  %v521 = vunpack.c.h.b16 %v115
  %v522 = vunpack.c.l.b16 %v116
  %v523 = vunpack.c.h.b16 %v116
  %v524 = vunpack.c.l.b16 %v117
  %v525 = vunpack.c.h.b16 %v117
  %v526 = vunpack.c.l.b16 %v118
  %v527 = vunpack.c.h.b16 %v118
  %v528 = vunpack.c.l.b16 %v119
  %v529 = vunpack.c.h.b16 %v119
  %v530 = vunpack.c.l.b16 %v120
  %v531 = vunpack.c.h.b16 %v120
  %v532 = vunpack.c.l.b16 %v121
  %v533 = vunpack.c.h.b16 %v121
  %v534 = vunpack.c.l.b16 %v122
  %v535 = vunpack.c.h.b16 %v122
  %v536 = vunpack.c.l.b16 %v123
  %v537 = vunpack.c.h.b16 %v123
  %v538 = vunpack.c.l.b16 %v124
  %v539 = vunpack.c.h.b16 %v124
  %v540 = vunpack.c.l.b16 %v125
  %v541 = vunpack.c.h.b16 %v125
  %v542 = vunpack.c.l.b16 %v126
  %v543 = vunpack.c.h.b16 %v126
  %v544 = vunpack.c.l.b16 %v127
  %v545 = vunpack.c.h.b16 %v127
  %v546 = vunpack.c.l.b16 %v128
  %v547 = vunpack.c.h.b16 %v128
  %v548 = vunpack.c.l.b16 %v129
  %v549 = vunpack.c.h.b16 %v129
  %v550 = vunpack.c.l.b16 %v130
  %v551 = vunpack.c.h.b16 %v130
  %v552 = vunpack.c.l.b16 %v131
  %v553 = vunpack.c.h.b16 %v131
  %v554 = vunpack.c.l.b16 %v132
  %v555 = vunpack.c.h.b16 %v132
  %v556 = vunpack.c.l.b16 %v133
  %v557 = vunpack.c.h.b16 %v133
  %v558 = vunpack.c.l.b16 %v134
  %v559 = vunpack.c.h.b16 %v134
  %v560 = vunpack.c.l.b16 %v135
  %v561 = vunpack.c.h.b16 %v135
  %v562 = vunpack.c.l.b16 %v136
  %v563 = vunpack.c.h.b16 %v136
  %v564 = vunpack.c.l.b16 %v137
  %v565 = vunpack.c.h.b16 %v137
  %v566 = vunpack.c.l.b16 %v138
  %v567 = vunpack.c.h.b16 %v138
  %v568 = vunpack.c.l.b16 %v139
  %v569 = vunpack.c.h.b16 %v139
  %v570 = vunpack.c.l.b16 %v140
  %v571 = vunpack.c.h.b16 %v140
  %v572 = vunpack.c.l.b16 %v141
  %v573 = vunpack.c.h.b16 %v141
  %v574 = vunpack.c.l.b16 %v142
  %v575 = vunpack.c.h.b16 %v142
  %v576 = vunpack.c.l.b16 %v143
  %v577 = vunpack.c.h.b16 %v143
  %v578 = vunpack.c.l.b16 %v144
  %v579 = vunpack.c.h.b16 %v144
  %v580 = vpack.c.b16 %v358, %v356
  %v581 = vpack.c.b16 %v359, %v357
  %v582 = vpack.c.b16 %v362, %v360
  %v583 = vpack.c.b16 %v363, %v361
  %v584 = vpack.c.b16 %v366, %v364
  %v585 = vpack.c.b16 %v367, %v365
  %v586 = vpack.c.b16 %v370, %v368
  %v587 = vpack.c.b16 %v371, %v369
  %v588 = vpack.c.b16 %v374, %v372
  %v589 = vpack.c.b16 %v375, %v373
  %v590 = vpack.c.b16 %v378, %v376
  %v591 = vpack.c.b16 %v379, %v377
  %v592 = vpack.c.b16 %v382, %v380
  %v593 = vpack.c.b16 %v383, %v381
  %v594 = vpack.c.b16 %v386, %v384
  %v595 = vpack.c.b16 %v387, %v385
  %v596 = vpack.c.b16 %v390, %v388
  %v597 = vpack.c.b16 %v391, %v389
  %v598 = vpack.c.b16 %v394, %v392
  %v599 = vpack.c.b16 %v395, %v393
  %v600 = vpack.c.b16 %v398, %v396
  %v601 = vpack.c.b16 %v399, %v397
  %v602 = vpack.c.b16 %v402, %v400
  %v603 = vpack.c.b16 %v403, %v401
  %v604 = vpack.c.b16 %v406, %v404
  %v605 = vpack.c.b16 %v407, %v405
  %v606 = vpack.c.b16 %v410, %v408
  %v607 = vpack.c.b16 %v411, %v409
  %v608 = vpack.c.b16 %v414, %v412
  %v609 = vpack.c.b16 %v415, %v413
  %v610 = vpack.c.b16 %v418, %v416
  %v611 = vpack.c.b16 %v419, %v417
  %v612 = vpack.c.b16 %v422, %v420
  %v613 = vpack.c.b16 %v423, %v421
  %v614 = vpack.c.b16 %v426, %v424
  %v615 = vpack.c.b16 %v427, %v425
  %v616 = vpack.c.b16 %v430, %v428
  %v617 = vpack.c.b16 %v431, %v429
  %v618 = vpack.c.b16 %v434, %v432
  %v619 = vpack.c.b16 %v435, %v433
  %v620 = vpack.c.b16 %v438, %v436
  %v621 = vpack.c.b16 %v439, %v437
  %v622 = vpack.c.b16 %v442, %v440
  %v623 = vpack.c.b16 %v443, %v441
  %v624 = vpack.c.b16 %v446, %v444
  %v625 = vpack.c.b16 %v447, %v445
  %v626 = vpack.c.b16 %v450, %v448
  %v627 = vpack.c.b16 %v451, %v449
  %v628 = vpack.c.b16 %v454, %v452
  %v629 = vpack.c.b16 %v455, %v453
  %v630 = vpack.c.b16 %v458, %v456
  %v631 = vpack.c.b16 %v459, %v457
  %v632 = vpack.c.b16 %v462, %v460
  %v633 = vpack.c.b16 %v463, %v461
  %v634 = vpack.c.b16 %v466, %v464
  %v635 = vpack.c.b16 %v467, %v465
  %v636 = vpack.c.b16 %v470, %v468
  %v637 = vpack.c.b16 %v471, %v469
  %v638 = vpack.c.b16 %v474, %v472
  %v639 = vpack.c.b16 %v475, %v473
  %v640 = vpack.c.b16 %v478, %v476
  %v641 = vpack.c.b16 %v479, %v477
  %v642 = vpack.c.b16 %v482, %v480
  %v643 = vpack.c.b16 %v483, %v481
  %v644 = vpack.c.b16 %v486, %v484
  %v645 = vpack.c.b16 %v487, %v485
  %v646 = vpack.c.b16 %v490, %v488
  %v647 = vpack.c.b16 %v491, %v489
  %v648 = vpack.c.b16 %v494, %v492
  %v649 = vpack.c.b16 %v495, %v493
  %v650 = vpack.c.b16 %v498, %v496
  %v651 = vpack.c.b16 %v499, %v497
  %v652 = vpack.c.b16 %v502, %v500
  %v653 = vpack.c.b16 %v503, %v501
  %v654 = vpack.c.b16 %v506, %v504
  %v655 = vpack.c.b16 %v507, %v505
  %v656 = vpack.c.b16 %v510, %v508
  %v657 = vpack.c.b16 %v511, %v509
  %v658 = vpack.c.b16 %v514, %v512
  %v659 = vpack.c.b16 %v515, %v513
  %v660 = vpack.c.b16 %v518, %v516
  %v661 = vpack.c.b16 %v519, %v517
  %v662 = vpack.c.b16 %v522, %v520
  %v663 = vpack.c.b16 %v523, %v521
  %v664 = vpack.c.b16 %v526, %v524
  %v665 = vpack.c.b16 %v527, %v525
  %v666 = vpack.c.b16 %v530, %v528
  %v667 = vpack.c.b16 %v531, %v529
  %v668 = vpack.c.b16 %v534, %v532
  %v669 = vpack.c.b16 %v535, %v533
  %v670 = vpack.c.b16 %v538, %v536
  %v671 = vpack.c.b16 %v539, %v537
  %v672 = vpack.c.b16 %v542, %v540
  %v673 = vpack.c.b16 %v543, %v541
  %v674 = vpack.c.b16 %v546, %v544
  %v675 = vpack.c.b16 %v547, %v545
  %v676 = vpack.c.b16 %v550, %v548
  %v677 = vpack.c.b16 %v551, %v549
  %v678 = vpack.c.b16 %v554, %v552
  %v679 = vpack.c.b16 %v555, %v553
  %v680 = vpack.c.b16 %v558, %v556
  %v681 = vpack.c.b16 %v559, %v557
  %v682 = vpack.c.b16 %v562, %v560
  %v683 = vpack.c.b16 %v563, %v561
  %v684 = vpack.c.b16 %v566, %v564
  %v685 = vpack.c.b16 %v567, %v565
  %v686 = vpack.c.b16 %v570, %v568
  %v687 = vpack.c.b16 %v571, %v569
  %v688 = vpack.c.b16 %v574, %v572
  %v689 = vpack.c.b16 %v575, %v573
  %v690 = vpack.c.b16 %v578, %v576
  %v691 = vpack.c.b16 %v579, %v577
  %804 = vmatprep.subr.bf16.mxu0 %v581
  %805 = vmatpush1.bf16.msra.mxu0 %v580
  %806 = vmatprep.subr.bf16.mxu0 %v583
  %807 = vmatpush1.bf16.msra.mxu0 %v582
  %808 = vmatprep.subr.bf16.mxu0 %v585
  %809 = vmatpush1.bf16.msra.mxu0 %v584
  %810 = vmatprep.subr.bf16.mxu0 %v587
  %811 = vmatpush1.bf16.msra.mxu0 %v586
  %812 = vmatprep.subr.bf16.mxu0 %v589
  %813 = vmatpush1.bf16.msra.mxu0 %v588
  %814 = vmatprep.subr.bf16.mxu0 %v591
  %815 = vmatpush1.bf16.msra.mxu0 %v590
  %816 = vmatprep.subr.bf16.mxu0 %v593
  %817 = vmatpush1.bf16.msra.mxu0 %v592
  %818 = vmatprep.subr.bf16.mxu0 %v595
  %819 = vmatpush1.bf16.msra.mxu0 %v594
  %820 = vmatprep.subr.bf16.mxu0 %v597
  %821 = vmatpush1.bf16.msra.mxu0 %v596
  %822 = vmatprep.subr.bf16.mxu0 %v599
  %823 = vmatpush1.bf16.msra.mxu0 %v598
  %824 = vmatprep.subr.bf16.mxu0 %v601
  %825 = vmatpush1.bf16.msra.mxu0 %v600
  %826 = vmatprep.subr.bf16.mxu0 %v603
  %827 = vmatpush1.bf16.msra.mxu0 %v602
  %828 = vmatprep.subr.bf16.mxu0 %v605
  %829 = vmatpush1.bf16.msra.mxu0 %v604
  %830 = vmatprep.subr.bf16.mxu0 %v607
  %831 = vmatpush1.bf16.msra.mxu0 %v606
  %832 = vmatprep.subr.bf16.mxu0 %v609
  %833 = vmatpush1.bf16.msra.mxu0 %v608
  %834 = vmatprep.subr.bf16.mxu0 %v611
  %835 = vmatpush1.bf16.msra.mxu0 %v610
  %836 = vmatprep.mubr.bf16.mxu0 %v231
  %837 = vmatmul.mubr.bf16.gmra.mrb[0].mxu0 %v230
  %v838 = vpop.f32.mrb[0].mxu0
  %v839 = vadd.f32 %v198, %v838
  %v840 = vpop.f32.mrb[0].mxu0
  %v841 = vadd.f32 %v202, %v840
  %v842 = vpop.f32.mrb[0].mxu0
  %v843 = vpop.f32.mrb[0].mxu0
  %844 = vdwg.mxu0
  %845 = vmatprep.subr.bf16.mxu0 %v613
  %846 = vmatpush1.bf16.msra.mxu0 %v612
  %847 = vmatprep.subr.bf16.mxu0 %v615
  %848 = vmatpush1.bf16.msra.mxu0 %v614
  %849 = vmatprep.subr.bf16.mxu0 %v617
  %850 = vmatpush1.bf16.msra.mxu0 %v616
  %851 = vmatprep.subr.bf16.mxu0 %v619
  %852 = vmatpush1.bf16.msra.mxu0 %v618
  %853 = vmatprep.subr.bf16.mxu0 %v621
  %854 = vmatpush1.bf16.msra.mxu0 %v620
  %855 = vmatprep.subr.bf16.mxu0 %v623
  %856 = vmatpush1.bf16.msra.mxu0 %v622
  %857 = vmatprep.subr.bf16.mxu0 %v625
  %858 = vmatpush1.bf16.msra.mxu0 %v624
  %859 = vmatprep.subr.bf16.mxu0 %v627
  %860 = vmatpush1.bf16.msra.mxu0 %v626
  %861 = vmatprep.subr.bf16.mxu0 %v629
  %862 = vmatpush1.bf16.msra.mxu0 %v628
  %863 = vmatprep.subr.bf16.mxu0 %v631
  %864 = vmatpush1.bf16.msra.mxu0 %v630
  %865 = vmatprep.subr.bf16.mxu0 %v633
  %866 = vmatpush1.bf16.msra.mxu0 %v632
  %867 = vmatprep.subr.bf16.mxu0 %v635
  %868 = vmatpush1.bf16.msra.mxu0 %v634
  %869 = vmatprep.subr.bf16.mxu0 %v637
  %870 = vmatpush1.bf16.msra.mxu0 %v636
  %871 = vmatprep.subr.bf16.mxu0 %v639
  %872 = vmatpush1.bf16.msra.mxu0 %v638
  %873 = vmatprep.subr.bf16.mxu0 %v641
  %874 = vmatpush1.bf16.msra.mxu0 %v640
  %875 = vmatprep.subr.bf16.mxu0 %v643
  %876 = vmatpush1.bf16.msra.mxu0 %v642
  %877 = vmatprep.mubr.bf16.mxu0 %v233
  %878 = vmatmul.mubr.bf16.gmra.mrb[0].mxu0 %v232
  %v879 = vpop.f32.mrb[0].mxu0
  %v880 = vadd.f32 %v839, %v879
  %v881 = vpop.f32.mrb[0].mxu0
  %v882 = vadd.f32 %v841, %v881
  %v883 = vpop.f32.mrb[0].mxu0
  %v884 = vpop.f32.mrb[0].mxu0
  %885 = vdwg.mxu0
  %886 = vmatprep.subr.bf16.mxu0 %v645
  %887 = vmatpush1.bf16.msra.mxu0 %v644
  %888 = vmatprep.subr.bf16.mxu0 %v647
  %889 = vmatpush1.bf16.msra.mxu0 %v646
  %890 = vmatprep.subr.bf16.mxu0 %v649
  %891 = vmatpush1.bf16.msra.mxu0 %v648
  %892 = vmatprep.subr.bf16.mxu0 %v651
  %893 = vmatpush1.bf16.msra.mxu0 %v650
  %894 = vmatprep.subr.bf16.mxu0 %v653
  %895 = vmatpush1.bf16.msra.mxu0 %v652
  %896 = vmatprep.subr.bf16.mxu0 %v655
  %897 = vmatpush1.bf16.msra.mxu0 %v654
  %898 = vmatprep.subr.bf16.mxu0 %v657
  %899 = vmatpush1.bf16.msra.mxu0 %v656
  %900 = vmatprep.subr.bf16.mxu0 %v659
  %901 = vmatpush1.bf16.msra.mxu0 %v658
  %902 = vmatprep.subr.bf16.mxu0 %v661
  %903 = vmatpush1.bf16.msra.mxu0 %v660
  %904 = vmatprep.subr.bf16.mxu0 %v663
  %905 = vmatpush1.bf16.msra.mxu0 %v662
  %906 = vmatprep.subr.bf16.mxu0 %v665
  %907 = vmatpush1.bf16.msra.mxu0 %v664
  %908 = vmatprep.subr.bf16.mxu0 %v667
  %909 = vmatpush1.bf16.msra.mxu0 %v666
  %910 = vmatprep.subr.bf16.mxu0 %v669
  %911 = vmatpush1.bf16.msra.mxu0 %v668
  %912 = vmatprep.subr.bf16.mxu0 %v671
  %913 = vmatpush1.bf16.msra.mxu0 %v670
  %914 = vmatprep.subr.bf16.mxu0 %v673
  %915 = vmatpush1.bf16.msra.mxu0 %v672
  %916 = vmatprep.subr.bf16.mxu0 %v675
  %917 = vmatpush1.bf16.msra.mxu0 %v674
  %918 = vmatprep.mubr.bf16.mxu0 %v235
  %919 = vmatmul.mubr.bf16.gmra.mrb[0].mxu0 %v234
  %v920 = vpop.f32.mrb[0].mxu0
  %v921 = vadd.f32 %v880, %v920
  %v922 = vpop.f32.mrb[0].mxu0
  %v923 = vadd.f32 %v882, %v922
  %v924 = vpop.f32.mrb[0].mxu0
  %v925 = vpop.f32.mrb[0].mxu0
  %926 = vdwg.mxu0
  %927 = vmatprep.subr.bf16.mxu0 %v677
  %928 = vmatpush1.bf16.msra.mxu0 %v676
  %929 = vmatprep.subr.bf16.mxu0 %v679
  %930 = vmatpush1.bf16.msra.mxu0 %v678
  %931 = vmatprep.subr.bf16.mxu0 %v681
  %932 = vmatpush1.bf16.msra.mxu0 %v680
  %933 = vmatprep.subr.bf16.mxu0 %v683
  %934 = vmatpush1.bf16.msra.mxu0 %v682
  %935 = vmatprep.subr.bf16.mxu0 %v685
  %936 = vmatpush1.bf16.msra.mxu0 %v684
  %937 = vmatprep.subr.bf16.mxu0 %v687
  %938 = vmatpush1.bf16.msra.mxu0 %v686
  %939 = vmatprep.subr.bf16.mxu0 %v689
  %940 = vmatpush1.bf16.msra.mxu0 %v688
  %941 = vmatprep.subr.bf16.mxu0 %v691
  %942 = vmatpush1.bf16.msra.mxu0 %v690
  %943 = vmatprep.subr.bf16.mxu0 0
  %944 = vmatpush1.bf16.msra.mxu0 0
  %945 = vmatprep.subr.bf16.mxu0 0
  %946 = vmatpush1.bf16.msra.mxu0 0
  %947 = vmatprep.subr.bf16.mxu0 0
  %948 = vmatpush1.bf16.msra.mxu0 0
  %949 = vmatprep.subr.bf16.mxu0 0
  %950 = vmatpush1.bf16.msra.mxu0 0
  %951 = vmatprep.subr.bf16.mxu0 0
  %952 = vmatpush1.bf16.msra.mxu0 0
  %953 = vmatprep.subr.bf16.mxu0 0
  %954 = vmatpush1.bf16.msra.mxu0 0
  %955 = vmatprep.subr.bf16.mxu0 0
  %956 = vmatpush1.bf16.msra.mxu0 0
  %957 = vmatprep.subr.bf16.mxu0 0
  %958 = vmatpush1.bf16.msra.mxu0 0
  %959 = vmatprep.mubr.bf16.mxu0 0
  %960 = vmatmul.mubr.bf16.gmra.mrb[0].mxu0 %v236
  %v961 = vpop.f32.mrb[0].mxu0
  %v962 = vadd.f32 %v921, %v961
  %v963 = vpop.f32.mrb[0].mxu0
  %v964 = vadd.f32 %v923, %v963
  %v965 = vpop.f32.mrb[0].mxu0
  %v966 = vpop.f32.mrb[0].mxu0
  %967 = vdwg.mxu0
  %vm968 = vcmp.gt.f32.partialorder 0.0, 1.0
  %v969 = vsel %vm968, 1, 0
  %v970 = vcvt.s32.f32 %v969
  %v971 = vadd.f32 %v962, 0.0
  %v972 = vadd.f32 %v964, 0.0
  %v973 = vsub.f32 %v971, %v970
  %v974 = vsub.f32 %v972, %v970
  %vm975 = vcmp.gt.f32.partialorder %v973, 1.0
  %vm976 = vcmp.gt.f32.partialorder %v974, 1.0
  %v977 = vsel %vm975, 1, 0
  %v978 = vsel %vm976, 1, 0
  %v979 = vcvt.s32.f32 %v977
  %v980 = vcvt.s32.f32 %v978
  %v981 = vpack.c.bf16 %v979, %v979
  %v982 = vpack.c.bf16 %v980, %v980
  %v1015 = vunpack.c.l.b16 %v145
  %v1016 = vunpack.c.l.b16 %v146
  %v1017 = vunpack.c.l.b16 %v147
  %v1018 = vunpack.c.l.b16 %v148
  %v1019 = vunpack.c.l.b16 %v149
  %v1020 = vunpack.c.l.b16 %v150
  %v1021 = vunpack.c.l.b16 %v151
  %v1022 = vunpack.c.l.b16 %v152
  %v1023 = vunpack.c.l.b16 %v153
  %v1024 = vunpack.c.l.b16 %v154
  %v1025 = vunpack.c.l.b16 %v155
  %v1026 = vunpack.c.l.b16 %v156
  %v1027 = vunpack.c.l.b16 %v157
  %v1028 = vunpack.c.l.b16 %v158
  %v1029 = vunpack.c.l.b16 %v159
  %v1030 = vunpack.c.l.b16 %v160
  %v1031 = vunpack.c.l.b16 %v161
  %v1032 = vunpack.c.l.b16 %v162
  %v1033 = vunpack.c.l.b16 %v163
  %v1034 = vunpack.c.l.b16 %v164
  %v1035 = vunpack.c.l.b16 %v165
  %v1036 = vunpack.c.l.b16 %v166
  %v1037 = vunpack.c.l.b16 %v167
  %v1038 = vunpack.c.l.b16 %v168
  %v1039 = vunpack.c.l.b16 %v169
  %v1040 = vunpack.c.l.b16 %v170
  %v1041 = vunpack.c.l.b16 %v171
  %v1042 = vunpack.c.l.b16 %v172
  %v1043 = vunpack.c.l.b16 %v173
  %v1044 = vunpack.c.l.b16 %v174
  %v1045 = vunpack.c.l.b16 %v175
  %v1046 = vunpack.c.l.b16 %v176
  %v1047 = vpack.c.b16 %v1016, %v1015
  %v1048 = vpack.c.b16 %v1018, %v1017
  %v1049 = vpack.c.b16 %v1020, %v1019
  %v1050 = vpack.c.b16 %v1022, %v1021
  %v1051 = vpack.c.b16 %v1024, %v1023
  %v1052 = vpack.c.b16 %v1026, %v1025
  %v1053 = vpack.c.b16 %v1028, %v1027
  %v1054 = vpack.c.b16 %v1030, %v1029
  %v1055 = vpack.c.b16 %v1032, %v1031
  %v1056 = vpack.c.b16 %v1034, %v1033
  %v1057 = vpack.c.b16 %v1036, %v1035
  %v1058 = vpack.c.b16 %v1038, %v1037
  %v1059 = vpack.c.b16 %v1040, %v1039
  %v1060 = vpack.c.b16 %v1042, %v1041
  %v1061 = vpack.c.b16 %v1044, %v1043
  %v1062 = vpack.c.b16 %v1046, %v1045
  %1079 = vmatprep.subr.bf16.mxu0 0
  %1080 = vmatpush1.bf16.msra.mxu0 %v1047
  %1081 = vmatprep.subr.bf16.mxu0 0
  %1082 = vmatpush1.bf16.msra.mxu0 %v1048
  %1083 = vmatprep.subr.bf16.mxu0 0
  %1084 = vmatpush1.bf16.msra.mxu0 %v1049
  %1085 = vmatprep.subr.bf16.mxu0 0
  %1086 = vmatpush1.bf16.msra.mxu0 %v1050
  %1087 = vmatprep.subr.bf16.mxu0 0
  %1088 = vmatpush1.bf16.msra.mxu0 %v1051
  %1089 = vmatprep.subr.bf16.mxu0 0
  %1090 = vmatpush1.bf16.msra.mxu0 %v1052
  %1091 = vmatprep.subr.bf16.mxu0 0
  %1092 = vmatpush1.bf16.msra.mxu0 %v1053
  %1093 = vmatprep.subr.bf16.mxu0 0
  %1094 = vmatpush1.bf16.msra.mxu0 %v1054
  %1095 = vmatprep.subr.bf16.mxu0 0
  %1096 = vmatpush1.bf16.msra.mxu0 %v1055
  %1097 = vmatprep.subr.bf16.mxu0 0
  %1098 = vmatpush1.bf16.msra.mxu0 %v1056
  %1099 = vmatprep.subr.bf16.mxu0 0
  %1100 = vmatpush1.bf16.msra.mxu0 %v1057
  %1101 = vmatprep.subr.bf16.mxu0 0
  %1102 = vmatpush1.bf16.msra.mxu0 %v1058
  %1103 = vmatprep.subr.bf16.mxu0 0
  %1104 = vmatpush1.bf16.msra.mxu0 %v1059
  %1105 = vmatprep.subr.bf16.mxu0 0
  %1106 = vmatpush1.bf16.msra.mxu0 %v1060
  %1107 = vmatprep.subr.bf16.mxu0 0
  %1108 = vmatpush1.bf16.msra.mxu0 %v1061
  %1109 = vmatprep.subr.bf16.mxu0 0
  %1110 = vmatpush1.bf16.msra.mxu0 %v1062
  %1111 = vmatprep.mubr.bf16.mxu0 %v982
  %1112 = vmatmul.mubr.bf16.gmra.mrb[0].mxu0 %v981
  %v1113 = vpop.f32.mrb[0].mxu0
  %v1114 = vadd.f32 %v210, %v1113
  %v1115 = vpop.f32.mrb[0].mxu0
  %v1116 = vpop.f32.mrb[0].mxu0
  %v1117 = vpop.f32.mrb[0].mxu0
  %1118 = vdwg.mxu0
  %v1119 = vadd.f32 %v1114, 0.0
  %v1120 = vsub.f32 %v1119, %v970
  %vm1121 = vcmp.gt.f32.partialorder %v1120, 1.0
  %v1122 = vsel %vm1121, 1, 0
  %v1123 = vcvt.s32.f32 %v1122
  %v1124 = vpack.c.bf16 %v1123, %v1123
  %v1141 = vunpack.c.l.b16 %v177
  %v1142 = vunpack.c.l.b16 %v178
  %v1143 = vunpack.c.l.b16 %v179
  %v1144 = vunpack.c.l.b16 %v180
  %v1145 = vunpack.c.l.b16 %v181
  %v1146 = vunpack.c.l.b16 %v182
  %v1147 = vunpack.c.l.b16 %v183
  %v1148 = vunpack.c.l.b16 %v184
  %v1149 = vunpack.c.l.b16 %v185
  %v1150 = vunpack.c.l.b16 %v186
  %v1151 = vunpack.c.l.b16 %v187
  %v1152 = vunpack.c.l.b16 %v188
  %v1153 = vunpack.c.l.b16 %v189
  %v1154 = vunpack.c.l.b16 %v190
  %v1155 = vunpack.c.l.b16 %v191
  %v1156 = vunpack.c.l.b16 %v192
  %v1157 = vpack.c.b16 %v1142, %v1141
  %v1158 = vpack.c.b16 %v1144, %v1143
  %v1159 = vpack.c.b16 %v1146, %v1145
  %v1160 = vpack.c.b16 %v1148, %v1147
  %v1161 = vpack.c.b16 %v1150, %v1149
  %v1162 = vpack.c.b16 %v1152, %v1151
  %v1163 = vpack.c.b16 %v1154, %v1153
  %v1164 = vpack.c.b16 %v1156, %v1155
  %1173 = vmatprep.subr.bf16.mxu0 0
  %1174 = vmatpush1.bf16.msra.mxu0 %v1157
  %1175 = vmatprep.subr.bf16.mxu0 0
  %1176 = vmatpush1.bf16.msra.mxu0 %v1158
  %1177 = vmatprep.subr.bf16.mxu0 0
  %1178 = vmatpush1.bf16.msra.mxu0 %v1159
  %1179 = vmatprep.subr.bf16.mxu0 0
  %1180 = vmatpush1.bf16.msra.mxu0 %v1160
  %1181 = vmatprep.subr.bf16.mxu0 0
  %1182 = vmatpush1.bf16.msra.mxu0 %v1161
  %1183 = vmatprep.subr.bf16.mxu0 0
  %1184 = vmatpush1.bf16.msra.mxu0 %v1162
  %1185 = vmatprep.subr.bf16.mxu0 0
  %1186 = vmatpush1.bf16.msra.mxu0 %v1163
  %1187 = vmatprep.subr.bf16.mxu0 0
  %1188 = vmatpush1.bf16.msra.mxu0 %v1164
  %1189 = vmatprep.subr.bf16.mxu0 0
  %1190 = vmatpush1.bf16.msra.mxu0 0
  %1191 = vmatprep.subr.bf16.mxu0 0
  %1192 = vmatpush1.bf16.msra.mxu0 0
  %1193 = vmatprep.subr.bf16.mxu0 0
  %1194 = vmatpush1.bf16.msra.mxu0 0
  %1195 = vmatprep.subr.bf16.mxu0 0
  %1196 = vmatpush1.bf16.msra.mxu0 0
  %1197 = vmatprep.subr.bf16.mxu0 0
  %1198 = vmatpush1.bf16.msra.mxu0 0
  %1199 = vmatprep.subr.bf16.mxu0 0
  %1200 = vmatpush1.bf16.msra.mxu0 0
  %1201 = vmatprep.subr.bf16.mxu0 0
  %1202 = vmatpush1.bf16.msra.mxu0 0
  %1203 = vmatprep.subr.bf16.mxu0 0
  %1204 = vmatpush1.bf16.msra.mxu0 0
  %1205 = vmatprep.mubr.bf16.mxu0 0
  %1206 = vmatmul.mubr.bf16.gmra.mrb[0].mxu0 %v1124
  %v1207 = vpop.f32.mrb[0].mxu0
  %v1208 = vadd.f32 %v217, %v1207
  %v1209 = vpop.f32.mrb[0].mxu0
  %v1210 = vpop.f32.mrb[0].mxu0
  %v1211 = vpop.f32.mrb[0].mxu0
  %1212 = vdwg.mxu0
  %v1213 = vadd.f32 %v1208, 0.0
  %v1214 = vsub.f32 %v1213, %v970
  %vm1215 = vcmp.gt.f32.partialorder %v1214, 1.0
  %v1216 = vsel %vm1215, 1, 0
  %v1217 = vcvt.s32.f32 %v1216
  %1218 = vst [vmem:[%s7] sm:$0xff] %v1217
  %1219 = vst [vmem:[%s8] sm:$0xff] %v1214
  %v1220 = vmul.f32 %v973, 0.9
  %v1221 = vmul.f32 %v974, 0.9
  %v1222 = vadd.f32 %v1220, %v962
  %v1223 = vadd.f32 %v1221, %v964
  %v1224 = vsub.f32 %v1222, %v979
  %v1225 = vsub.f32 %v1223, %v980
  %vm1226 = vcmp.gt.f32.partialorder %v1224, 1.0
  %vm1227 = vcmp.gt.f32.partialorder %v1225, 1.0
  %v1228 = vsel %vm1226, 1, 0
  %v1229 = vsel %vm1227, 1, 0
  %v1230 = vcvt.s32.f32 %v1228
  %v1231 = vcvt.s32.f32 %v1229
  %v1232 = vpack.c.bf16 %v1230, %v1230
  %v1233 = vpack.c.bf16 %v1231, %v1231
  %1234 = vmatprep.subr.bf16.mxu0 0
  %1235 = vmatpush1.bf16.msra.mxu0 %v1047
  %1236 = vmatprep.subr.bf16.mxu0 0
  %1237 = vmatpush1.bf16.msra.mxu0 %v1048
  %1238 = vmatprep.subr.bf16.mxu0 0
  %1239 = vmatpush1.bf16.msra.mxu0 %v1049
  %1240 = vmatprep.subr.bf16.mxu0 0
  %1241 = vmatpush1.bf16.msra.mxu0 %v1050
  %1242 = vmatprep.subr.bf16.mxu0 0
  %1243 = vmatpush1.bf16.msra.mxu0 %v1051
  %1244 = vmatprep.subr.bf16.mxu0 0
  %1245 = vmatpush1.bf16.msra.mxu0 %v1052
  %1246 = vmatprep.subr.bf16.mxu0 0
  %1247 = vmatpush1.bf16.msra.mxu0 %v1053
  %1248 = vmatprep.subr.bf16.mxu0 0
  %1249 = vmatpush1.bf16.msra.mxu0 %v1054
  %1250 = vmatprep.subr.bf16.mxu0 0
  %1251 = vmatpush1.bf16.msra.mxu0 %v1055
  %1252 = vmatprep.subr.bf16.mxu0 0
  %1253 = vmatpush1.bf16.msra.mxu0 %v1056
  %1254 = vmatprep.subr.bf16.mxu0 0
  %1255 = vmatpush1.bf16.msra.mxu0 %v1057
  %1256 = vmatprep.subr.bf16.mxu0 0
  %1257 = vmatpush1.bf16.msra.mxu0 %v1058
  %1258 = vmatprep.subr.bf16.mxu0 0
  %1259 = vmatpush1.bf16.msra.mxu0 %v1059
  %1260 = vmatprep.subr.bf16.mxu0 0
  %1261 = vmatpush1.bf16.msra.mxu0 %v1060
  %1262 = vmatprep.subr.bf16.mxu0 0
  %1263 = vmatpush1.bf16.msra.mxu0 %v1061
  %1264 = vmatprep.subr.bf16.mxu0 0
  %1265 = vmatpush1.bf16.msra.mxu0 %v1062
  %1266 = vmatprep.mubr.bf16.mxu0 %v1233
  %1267 = vmatmul.mubr.bf16.gmra.mrb[0].mxu0 %v1232
  %v1268 = vpop.f32.mrb[0].mxu0
  %v1269 = vadd.f32 %v210, %v1268
  %v1270 = vpop.f32.mrb[0].mxu0
  %v1271 = vpop.f32.mrb[0].mxu0
  %v1272 = vpop.f32.mrb[0].mxu0
  %1273 = vdwg.mxu0
  %v1274 = vmul.f32 %v1120, 0.9
  %v1275 = vadd.f32 %v1274, %v1269
  %v1276 = vsub.f32 %v1275, %v1123
  %vm1277 = vcmp.gt.f32.partialorder %v1276, 1.0
  %v1278 = vsel %vm1277, 1, 0
  %v1279 = vcvt.s32.f32 %v1278
  %v1280 = vpack.c.bf16 %v1279, %v1279
  %1281 = vmatprep.subr.bf16.mxu0 0
  %1282 = vmatpush1.bf16.msra.mxu0 %v1157
  %1283 = vmatprep.subr.bf16.mxu0 0
  %1284 = vmatpush1.bf16.msra.mxu0 %v1158
  %1285 = vmatprep.subr.bf16.mxu0 0
  %1286 = vmatpush1.bf16.msra.mxu0 %v1159
  %1287 = vmatprep.subr.bf16.mxu0 0
  %1288 = vmatpush1.bf16.msra.mxu0 %v1160
  %1289 = vmatprep.subr.bf16.mxu0 0
  %1290 = vmatpush1.bf16.msra.mxu0 %v1161
  %1291 = vmatprep.subr.bf16.mxu0 0
  %1292 = vmatpush1.bf16.msra.mxu0 %v1162
  %1293 = vmatprep.subr.bf16.mxu0 0
  %1294 = vmatpush1.bf16.msra.mxu0 %v1163
  %1295 = vmatprep.subr.bf16.mxu0 0
  %1296 = vmatpush1.bf16.msra.mxu0 %v1164
  %1297 = vmatprep.subr.bf16.mxu0 0
  %1298 = vmatpush1.bf16.msra.mxu0 0
  %1299 = vmatprep.subr.bf16.mxu0 0
  %1300 = vmatpush1.bf16.msra.mxu0 0
  %1301 = vmatprep.subr.bf16.mxu0 0
  %1302 = vmatpush1.bf16.msra.mxu0 0
  %1303 = vmatprep.subr.bf16.mxu0 0
  %1304 = vmatpush1.bf16.msra.mxu0 0
  %1305 = vmatprep.subr.bf16.mxu0 0
  %1306 = vmatpush1.bf16.msra.mxu0 0
  %1307 = vmatprep.subr.bf16.mxu0 0
  %1308 = vmatpush1.bf16.msra.mxu0 0
  %1309 = vmatprep.subr.bf16.mxu0 0
  %1310 = vmatpush1.bf16.msra.mxu0 0
  %1311 = vmatprep.subr.bf16.mxu0 0
  %1312 = vmatpush1.bf16.msra.mxu0 0
  %1313 = vmatprep.mubr.bf16.mxu0 0
  %1314 = vmatmul.mubr.bf16.gmra.mrb[0].mxu0 %v1280
  %v1315 = vpop.f32.mrb[0].mxu0
  %v1316 = vadd.f32 %v217, %v1315
  %v1317 = vpop.f32.mrb[0].mxu0
  %v1318 = vpop.f32.mrb[0].mxu0
  %v1319 = vpop.f32.mrb[0].mxu0
  %1320 = vdwg.mxu0
  %v1321 = vmul.f32 %v1214, 0.9
  %v1322 = vadd.f32 %v1321, %v1316
  %v1323 = vsub.f32 %v1322, %v1217
  %vm1324 = vcmp.gt.f32.partialorder %v1323, 1.0
  %v1325 = vsel %vm1324, 1, 0
  %v1326 = vcvt.s32.f32 %v1325
  %s1327 = scalar_lea.vmem %s7, 8
  %1328 = vst [vmem:[%s1327] sm:$0xff] %v1326
  %s1329 = scalar_lea.vmem %s8, 8
  %1330 = vst [vmem:[%s1329] sm:$0xff] %v1323
  %v1331 = vmul.f32 %v1224, 0.9
  %v1332 = vmul.f32 %v1225, 0.9
  %v1333 = vadd.f32 %v1331, %v962
  %v1334 = vadd.f32 %v1332, %v964
  %v1335 = vsub.f32 %v1333, %v1230
  %v1336 = vsub.f32 %v1334, %v1231
  %vm1337 = vcmp.gt.f32.partialorder %v1335, 1.0
  %vm1338 = vcmp.gt.f32.partialorder %v1336, 1.0
  %v1339 = vsel %vm1337, 1, 0
  %v1340 = vsel %vm1338, 1, 0
  %v1341 = vcvt.s32.f32 %v1339
  %v1342 = vcvt.s32.f32 %v1340
  %v1343 = vpack.c.bf16 %v1341, %v1341
  %v1344 = vpack.c.bf16 %v1342, %v1342
  %1345 = vmatprep.subr.bf16.mxu0 0
  %1346 = vmatpush1.bf16.msra.mxu0 %v1047
  %1347 = vmatprep.subr.bf16.mxu0 0
  %1348 = vmatpush1.bf16.msra.mxu0 %v1048
  %1349 = vmatprep.subr.bf16.mxu0 0
  %1350 = vmatpush1.bf16.msra.mxu0 %v1049
  %1351 = vmatprep.subr.bf16.mxu0 0
  %1352 = vmatpush1.bf16.msra.mxu0 %v1050
  %1353 = vmatprep.subr.bf16.mxu0 0
  %1354 = vmatpush1.bf16.msra.mxu0 %v1051
  %1355 = vmatprep.subr.bf16.mxu0 0
  %1356 = vmatpush1.bf16.msra.mxu0 %v1052
  %1357 = vmatprep.subr.bf16.mxu0 0
  %1358 = vmatpush1.bf16.msra.mxu0 %v1053
  %1359 = vmatprep.subr.bf16.mxu0 0
  %1360 = vmatpush1.bf16.msra.mxu0 %v1054
  %1361 = vmatprep.subr.bf16.mxu0 0
  %1362 = vmatpush1.bf16.msra.mxu0 %v1055
  %1363 = vmatprep.subr.bf16.mxu0 0
  %1364 = vmatpush1.bf16.msra.mxu0 %v1056
  %1365 = vmatprep.subr.bf16.mxu0 0
  %1366 = vmatpush1.bf16.msra.mxu0 %v1057
  %1367 = vmatprep.subr.bf16.mxu0 0
  %1368 = vmatpush1.bf16.msra.mxu0 %v1058
  %1369 = vmatprep.subr.bf16.mxu0 0
  %1370 = vmatpush1.bf16.msra.mxu0 %v1059
  %1371 = vmatprep.subr.bf16.mxu0 0
  %1372 = vmatpush1.bf16.msra.mxu0 %v1060
  %1373 = vmatprep.subr.bf16.mxu0 0
  %1374 = vmatpush1.bf16.msra.mxu0 %v1061
  %1375 = vmatprep.subr.bf16.mxu0 0
  %1376 = vmatpush1.bf16.msra.mxu0 %v1062
  %1377 = vmatprep.mubr.bf16.mxu0 %v1344
  %1378 = vmatmul.mubr.bf16.gmra.mrb[0].mxu0 %v1343
  %v1379 = vpop.f32.mrb[0].mxu0
  %v1380 = vadd.f32 %v210, %v1379
  %v1381 = vpop.f32.mrb[0].mxu0
  %v1382 = vpop.f32.mrb[0].mxu0
  %v1383 = vpop.f32.mrb[0].mxu0
  %1384 = vdwg.mxu0
  %v1385 = vmul.f32 %v1276, 0.9
  %v1386 = vadd.f32 %v1385, %v1380
  %v1387 = vsub.f32 %v1386, %v1279
  %vm1388 = vcmp.gt.f32.partialorder %v1387, 1.0
  %v1389 = vsel %vm1388, 1, 0
  %v1390 = vcvt.s32.f32 %v1389
  %v1391 = vpack.c.bf16 %v1390, %v1390
  %1392 = vmatprep.subr.bf16.mxu0 0
  %1393 = vmatpush1.bf16.msra.mxu0 %v1157
  %1394 = vmatprep.subr.bf16.mxu0 0
  %1395 = vmatpush1.bf16.msra.mxu0 %v1158
  %1396 = vmatprep.subr.bf16.mxu0 0
  %1397 = vmatpush1.bf16.msra.mxu0 %v1159
  %1398 = vmatprep.subr.bf16.mxu0 0
  %1399 = vmatpush1.bf16.msra.mxu0 %v1160
  %1400 = vmatprep.subr.bf16.mxu0 0
  %1401 = vmatpush1.bf16.msra.mxu0 %v1161
  %1402 = vmatprep.subr.bf16.mxu0 0
  %1403 = vmatpush1.bf16.msra.mxu0 %v1162
  %1404 = vmatprep.subr.bf16.mxu0 0
  %1405 = vmatpush1.bf16.msra.mxu0 %v1163
  %1406 = vmatprep.subr.bf16.mxu0 0
  %1407 = vmatpush1.bf16.msra.mxu0 %v1164
  %1408 = vmatprep.subr.bf16.mxu0 0
  %1409 = vmatpush1.bf16.msra.mxu0 0
  %1410 = vmatprep.subr.bf16.mxu0 0
  %1411 = vmatpush1.bf16.msra.mxu0 0
  %1412 = vmatprep.subr.bf16.mxu0 0
  %1413 = vmatpush1.bf16.msra.mxu0 0
  %1414 = vmatprep.subr.bf16.mxu0 0
  %1415 = vmatpush1.bf16.msra.mxu0 0
  %1416 = vmatprep.subr.bf16.mxu0 0
  %1417 = vmatpush1.bf16.msra.mxu0 0
  %1418 = vmatprep.subr.bf16.mxu0 0
  %1419 = vmatpush1.bf16.msra.mxu0 0
  %1420 = vmatprep.subr.bf16.mxu0 0
  %1421 = vmatpush1.bf16.msra.mxu0 0
  %1422 = vmatprep.subr.bf16.mxu0 0
  %1423 = vmatpush1.bf16.msra.mxu0 0
  %1424 = vmatprep.mubr.bf16.mxu0 0
  %1425 = vmatmul.mubr.bf16.gmra.mrb[0].mxu0 %v1391
  %v1426 = vpop.f32.mrb[0].mxu0
  %v1427 = vadd.f32 %v217, %v1426
  %v1428 = vpop.f32.mrb[0].mxu0
  %v1429 = vpop.f32.mrb[0].mxu0
  %v1430 = vpop.f32.mrb[0].mxu0
  %1431 = vdwg.mxu0
  %v1432 = vmul.f32 %v1323, 0.9
  %v1433 = vadd.f32 %v1432, %v1427
  %v1434 = vsub.f32 %v1433, %v1326
  %vm1435 = vcmp.gt.f32.partialorder %v1434, 1.0
  %v1436 = vsel %vm1435, 1, 0
  %v1437 = vcvt.s32.f32 %v1436
  %s1438 = scalar_lea.vmem %s7, 16
  %1439 = vst [vmem:[%s1438] sm:$0xff] %v1437
  %s1440 = scalar_lea.vmem %s8, 16
  %1441 = vst [vmem:[%s1440] sm:$0xff] %v1434
  %v1442 = vmul.f32 %v1335, 0.9
  %v1443 = vmul.f32 %v1336, 0.9
  %v1444 = vadd.f32 %v1442, %v962
  %v1445 = vadd.f32 %v1443, %v964
  %v1446 = vsub.f32 %v1444, %v1341
  %v1447 = vsub.f32 %v1445, %v1342
  %vm1448 = vcmp.gt.f32.partialorder %v1446, 1.0
  %vm1449 = vcmp.gt.f32.partialorder %v1447, 1.0
  %v1450 = vsel %vm1448, 1, 0
  %v1451 = vsel %vm1449, 1, 0
  %v1452 = vcvt.s32.f32 %v1450
  %v1453 = vcvt.s32.f32 %v1451
  %v1454 = vpack.c.bf16 %v1452, %v1452
  %v1455 = vpack.c.bf16 %v1453, %v1453
  %1456 = vmatprep.subr.bf16.mxu0 0
  %1457 = vmatpush1.bf16.msra.mxu0 %v1047
  %1458 = vmatprep.subr.bf16.mxu0 0
  %1459 = vmatpush1.bf16.msra.mxu0 %v1048
  %1460 = vmatprep.subr.bf16.mxu0 0
  %1461 = vmatpush1.bf16.msra.mxu0 %v1049
  %1462 = vmatprep.subr.bf16.mxu0 0
  %1463 = vmatpush1.bf16.msra.mxu0 %v1050
  %1464 = vmatprep.subr.bf16.mxu0 0
  %1465 = vmatpush1.bf16.msra.mxu0 %v1051
  %1466 = vmatprep.subr.bf16.mxu0 0
  %1467 = vmatpush1.bf16.msra.mxu0 %v1052
  %1468 = vmatprep.subr.bf16.mxu0 0
  %1469 = vmatpush1.bf16.msra.mxu0 %v1053
  %1470 = vmatprep.subr.bf16.mxu0 0
  %1471 = vmatpush1.bf16.msra.mxu0 %v1054
  %1472 = vmatprep.subr.bf16.mxu0 0
  %1473 = vmatpush1.bf16.msra.mxu0 %v1055
  %1474 = vmatprep.subr.bf16.mxu0 0
  %1475 = vmatpush1.bf16.msra.mxu0 %v1056
  %1476 = vmatprep.subr.bf16.mxu0 0
  %1477 = vmatpush1.bf16.msra.mxu0 %v1057
  %1478 = vmatprep.subr.bf16.mxu0 0
  %1479 = vmatpush1.bf16.msra.mxu0 %v1058
  %1480 = vmatprep.subr.bf16.mxu0 0
  %1481 = vmatpush1.bf16.msra.mxu0 %v1059
  %1482 = vmatprep.subr.bf16.mxu0 0
  %1483 = vmatpush1.bf16.msra.mxu0 %v1060
  %1484 = vmatprep.subr.bf16.mxu0 0
  %1485 = vmatpush1.bf16.msra.mxu0 %v1061
  %1486 = vmatprep.subr.bf16.mxu0 0
  %1487 = vmatpush1.bf16.msra.mxu0 %v1062
  %1488 = vmatprep.mubr.bf16.mxu0 %v1455
  %1489 = vmatmul.mubr.bf16.gmra.mrb[0].mxu0 %v1454
  %v1490 = vpop.f32.mrb[0].mxu0
  %v1491 = vadd.f32 %v210, %v1490
  %v1492 = vpop.f32.mrb[0].mxu0
  %v1493 = vpop.f32.mrb[0].mxu0
  %v1494 = vpop.f32.mrb[0].mxu0
  %1495 = vdwg.mxu0
  %v1496 = vmul.f32 %v1387, 0.9
  %v1497 = vadd.f32 %v1496, %v1491
  %v1498 = vsub.f32 %v1497, %v1390
  %vm1499 = vcmp.gt.f32.partialorder %v1498, 1.0
  %v1500 = vsel %vm1499, 1, 0
  %v1501 = vcvt.s32.f32 %v1500
  %v1502 = vpack.c.bf16 %v1501, %v1501
  %1503 = vmatprep.subr.bf16.mxu0 0
  %1504 = vmatpush1.bf16.msra.mxu0 %v1157
  %1505 = vmatprep.subr.bf16.mxu0 0
  %1506 = vmatpush1.bf16.msra.mxu0 %v1158
  %1507 = vmatprep.subr.bf16.mxu0 0
  %1508 = vmatpush1.bf16.msra.mxu0 %v1159
  %1509 = vmatprep.subr.bf16.mxu0 0
  %1510 = vmatpush1.bf16.msra.mxu0 %v1160
  %1511 = vmatprep.subr.bf16.mxu0 0
  %1512 = vmatpush1.bf16.msra.mxu0 %v1161
  %1513 = vmatprep.subr.bf16.mxu0 0
  %1514 = vmatpush1.bf16.msra.mxu0 %v1162
  %1515 = vmatprep.subr.bf16.mxu0 0
  %1516 = vmatpush1.bf16.msra.mxu0 %v1163
  %1517 = vmatprep.subr.bf16.mxu0 0
  %1518 = vmatpush1.bf16.msra.mxu0 %v1164
  %1519 = vmatprep.subr.bf16.mxu0 0
  %1520 = vmatpush1.bf16.msra.mxu0 0
  %1521 = vmatprep.subr.bf16.mxu0 0
  %1522 = vmatpush1.bf16.msra.mxu0 0
  %1523 = vmatprep.subr.bf16.mxu0 0
  %1524 = vmatpush1.bf16.msra.mxu0 0
  %1525 = vmatprep.subr.bf16.mxu0 0
  %1526 = vmatpush1.bf16.msra.mxu0 0
  %1527 = vmatprep.subr.bf16.mxu0 0
  %1528 = vmatpush1.bf16.msra.mxu0 0
  %1529 = vmatprep.subr.bf16.mxu0 0
  %1530 = vmatpush1.bf16.msra.mxu0 0
  %1531 = vmatprep.subr.bf16.mxu0 0
  %1532 = vmatpush1.bf16.msra.mxu0 0
  %1533 = vmatprep.subr.bf16.mxu0 0
  %1534 = vmatpush1.bf16.msra.mxu0 0
  %1535 = vmatprep.mubr.bf16.mxu0 0
  %1536 = vmatmul.mubr.bf16.gmra.mrb[0].mxu0 %v1502
  %v1537 = vpop.f32.mrb[0].mxu0
  %v1538 = vadd.f32 %v217, %v1537
  %v1539 = vpop.f32.mrb[0].mxu0
  %v1540 = vpop.f32.mrb[0].mxu0
  %v1541 = vpop.f32.mrb[0].mxu0
  %1542 = vdwg.mxu0
  %v1543 = vmul.f32 %v1434, 0.9
  %v1544 = vadd.f32 %v1543, %v1538
  %v1545 = vsub.f32 %v1544, %v1437
  %vm1546 = vcmp.gt.f32.partialorder %v1545, 1.0
  %v1547 = vsel %vm1546, 1, 0
  %v1548 = vcvt.s32.f32 %v1547
  %s1549 = scalar_lea.vmem %s7, 24
  %1550 = vst [vmem:[%s1549] sm:$0xff] %v1548
  %s1551 = scalar_lea.vmem %s8, 24
  %1552 = vst [vmem:[%s1551] sm:$0xff] %v1545
  %v1553 = vmul.f32 %v1446, 0.9
  %v1554 = vmul.f32 %v1447, 0.9
  %v1555 = vadd.f32 %v1553, %v962
  %v1556 = vadd.f32 %v1554, %v964
  %v1557 = vsub.f32 %v1555, %v1452
  %v1558 = vsub.f32 %v1556, %v1453
  %vm1559 = vcmp.gt.f32.partialorder %v1557, 1.0
  %vm1560 = vcmp.gt.f32.partialorder %v1558, 1.0
  %v1561 = vsel %vm1559, 1, 0
  %v1562 = vsel %vm1560, 1, 0
  %v1563 = vcvt.s32.f32 %v1561
  %v1564 = vcvt.s32.f32 %v1562
  %v1565 = vpack.c.bf16 %v1563, %v1563
  %v1566 = vpack.c.bf16 %v1564, %v1564
  %1567 = vmatprep.subr.bf16.mxu0 0
  %1568 = vmatpush1.bf16.msra.mxu0 %v1047
  %1569 = vmatprep.subr.bf16.mxu0 0
  %1570 = vmatpush1.bf16.msra.mxu0 %v1048
  %1571 = vmatprep.subr.bf16.mxu0 0
  %1572 = vmatpush1.bf16.msra.mxu0 %v1049
  %1573 = vmatprep.subr.bf16.mxu0 0
  %1574 = vmatpush1.bf16.msra.mxu0 %v1050
  %1575 = vmatprep.subr.bf16.mxu0 0
  %1576 = vmatpush1.bf16.msra.mxu0 %v1051
  %1577 = vmatprep.subr.bf16.mxu0 0
  %1578 = vmatpush1.bf16.msra.mxu0 %v1052
  %1579 = vmatprep.subr.bf16.mxu0 0
  %1580 = vmatpush1.bf16.msra.mxu0 %v1053
  %1581 = vmatprep.subr.bf16.mxu0 0
  %1582 = vmatpush1.bf16.msra.mxu0 %v1054
  %1583 = vmatprep.subr.bf16.mxu0 0
  %1584 = vmatpush1.bf16.msra.mxu0 %v1055
  %1585 = vmatprep.subr.bf16.mxu0 0
  %1586 = vmatpush1.bf16.msra.mxu0 %v1056
  %1587 = vmatprep.subr.bf16.mxu0 0
  %1588 = vmatpush1.bf16.msra.mxu0 %v1057
  %1589 = vmatprep.subr.bf16.mxu0 0
  %1590 = vmatpush1.bf16.msra.mxu0 %v1058
  %1591 = vmatprep.subr.bf16.mxu0 0
  %1592 = vmatpush1.bf16.msra.mxu0 %v1059
  %1593 = vmatprep.subr.bf16.mxu0 0
  %1594 = vmatpush1.bf16.msra.mxu0 %v1060
  %1595 = vmatprep.subr.bf16.mxu0 0
  %1596 = vmatpush1.bf16.msra.mxu0 %v1061
  %1597 = vmatprep.subr.bf16.mxu0 0
  %1598 = vmatpush1.bf16.msra.mxu0 %v1062
  %1599 = vmatprep.mubr.bf16.mxu0 %v1566
  %1600 = vmatmul.mubr.bf16.gmra.mrb[0].mxu0 %v1565
  %v1601 = vpop.f32.mrb[0].mxu0
  %v1602 = vadd.f32 %v210, %v1601
  %v1603 = vpop.f32.mrb[0].mxu0
  %v1604 = vpop.f32.mrb[0].mxu0
  %v1605 = vpop.f32.mrb[0].mxu0
  %1606 = vdwg.mxu0
  %v1607 = vmul.f32 %v1498, 0.9
  %v1608 = vadd.f32 %v1607, %v1602
  %v1609 = vsub.f32 %v1608, %v1501
  %vm1610 = vcmp.gt.f32.partialorder %v1609, 1.0
  %v1611 = vsel %vm1610, 1, 0
  %v1612 = vcvt.s32.f32 %v1611
  %v1613 = vpack.c.bf16 %v1612, %v1612
  %1614 = vmatprep.subr.bf16.mxu0 0
  %1615 = vmatpush1.bf16.msra.mxu0 %v1157
  %1616 = vmatprep.subr.bf16.mxu0 0
  %1617 = vmatpush1.bf16.msra.mxu0 %v1158
  %1618 = vmatprep.subr.bf16.mxu0 0
  %1619 = vmatpush1.bf16.msra.mxu0 %v1159
  %1620 = vmatprep.subr.bf16.mxu0 0
  %1621 = vmatpush1.bf16.msra.mxu0 %v1160
  %1622 = vmatprep.subr.bf16.mxu0 0
  %1623 = vmatpush1.bf16.msra.mxu0 %v1161
  %1624 = vmatprep.subr.bf16.mxu0 0
  %1625 = vmatpush1.bf16.msra.mxu0 %v1162
  %1626 = vmatprep.subr.bf16.mxu0 0
  %1627 = vmatpush1.bf16.msra.mxu0 %v1163
  %1628 = vmatprep.subr.bf16.mxu0 0
  %1629 = vmatpush1.bf16.msra.mxu0 %v1164
  %1630 = vmatprep.subr.bf16.mxu0 0
  %1631 = vmatpush1.bf16.msra.mxu0 0
  %1632 = vmatprep.subr.bf16.mxu0 0
  %1633 = vmatpush1.bf16.msra.mxu0 0
  %1634 = vmatprep.subr.bf16.mxu0 0
  %1635 = vmatpush1.bf16.msra.mxu0 0
  %1636 = vmatprep.subr.bf16.mxu0 0
  %1637 = vmatpush1.bf16.msra.mxu0 0
  %1638 = vmatprep.subr.bf16.mxu0 0
  %1639 = vmatpush1.bf16.msra.mxu0 0
  %1640 = vmatprep.subr.bf16.mxu0 0
  %1641 = vmatpush1.bf16.msra.mxu0 0
  %1642 = vmatprep.subr.bf16.mxu0 0
  %1643 = vmatpush1.bf16.msra.mxu0 0
  %1644 = vmatprep.subr.bf16.mxu0 0
  %1645 = vmatpush1.bf16.msra.mxu0 0
  %1646 = vmatprep.mubr.bf16.mxu0 0
  %1647 = vmatmul.mubr.bf16.gmra.mrb[0].mxu0 %v1613
  %v1648 = vpop.f32.mrb[0].mxu0
  %v1649 = vadd.f32 %v217, %v1648
  %v1650 = vpop.f32.mrb[0].mxu0
  %v1651 = vpop.f32.mrb[0].mxu0
  %v1652 = vpop.f32.mrb[0].mxu0
  %1653 = vdwg.mxu0
  %v1654 = vmul.f32 %v1545, 0.9
  %v1655 = vadd.f32 %v1654, %v1649
  %v1656 = vsub.f32 %v1655, %v1548
  %vm1657 = vcmp.gt.f32.partialorder %v1656, 1.0
  %v1658 = vsel %vm1657, 1, 0
  %v1659 = vcvt.s32.f32 %v1658
  %s1660 = scalar_lea.vmem %s7, 32
  %1661 = vst [vmem:[%s1660] sm:$0xff] %v1659
  %s1662 = scalar_lea.vmem %s8, 32
  %1663 = vst [vmem:[%s1662] sm:$0xff] %v1656
  // Predicated region
  $region30: #{netfc_forward.1} parent=0 // pred_check
    _
  $region31: #{netfc_forward.1} parent=0 // pred_check_branch
    %1665 = sbr.rel (0) target = $region33
  $region32: #{netfc_forward.1} parent=0 // pred_region
    _
  $region33: #{netfc_forward.1} parent=0 // pred_fallthru
    _
  // Predicated region
  $region34: #{netfc_forward.1} parent=0 // pred_check
    _
  $region35: #{netfc_forward.1} parent=0 // pred_check_branch
    %1667 = sbr.rel (0) target = $region37
  $region36: #{netfc_forward.1} parent=0 // pred_region
    _
  $region37: #{netfc_forward.1} parent=0 // pred_fallthru
    _
  // Predicated region
  $region38: #{netfc_forward.1} parent=0 // pred_check
    _
  $region39: #{netfc_forward.1} parent=0 // pred_check_branch
    %1669 = sbr.rel (0) target = $region41
  $region40: #{netfc_forward.1} parent=0 // pred_region
    _
  $region41: #{netfc_forward.1} parent=0 // pred_fallthru
    _
  // Predicated region
  $region42: #{netfc_forward.1} parent=0 // pred_check
    _
  $region43: #{netfc_forward.1} parent=0 // pred_check_branch
    %1671 = sbr.rel (0) target = $region45
  $region44: #{netfc_forward.1} parent=0 // pred_region
    _
  $region45: #{netfc_forward.1} parent=0 // pred_fallthru
    _

</llo_original>
